<compile_context>
chip_gen: v7x
topology: tpu7x:2x2x1
jax: 0.10.0
libtpu: 0.0.40
codegen_flags: <defaults>
</compile_context>

<pallas_src>
import functools

import jax
import jax.numpy as jnp
from jax.experimental import pallas as pl
from jax.experimental.pallas import tpu as pltpu

KSIZE = 5
PAD = 2
BN_EPS = 1e-5
LANE = 128


def _round_up(v, m):
    return ((v + m - 1) // m) * m


def _conv_rows(x_ref, w_ref, pos, *, c_in, c_out, l_real, tile_t):
    """Conv1d(k=5, padding=2, bias=False) over a lane-dense (C, tile_t) tile.

    pos[j] = position of lane j inside its sample. Halo shifts use pltpu.roll
    plus a boundary mask; loop order bounds live values to 1 tap + c_out
    accumulators.
    """
    rows = [jnp.zeros((1, tile_t), jnp.float32) for _ in range(c_out)]
    for i in range(c_in):
        xi = x_ref[pl.ds(i, 1), :].astype(jnp.float32)           # (1, tile_t)
        for k in range(KSIZE):
            d = k - PAD                                           # tap offset in [-2, 2]
            if d == 0:
                tap = xi
            else:
                shifted = pltpu.roll(xi, (-d) % tile_t, axis=1)   # tap[j] = xi[j + d]
                if d > 0:
                    mask = pos < (l_real - d)
                else:
                    mask = pos >= (-d)
                tap = jnp.where(mask, shifted, 0.0)               # zero across sample edges
            for o in range(c_out):
                rows[o] = rows[o] + w_ref[(o * c_in + i) * KSIZE + k] * tap
    return rows


def _fast_kernel(w_ref, gamma_ref, beta_ref, x_ref, out_ref, *,
                 c_in, c_out, stride, l_real, n_valid, inv_count, is_res_con):
    """Single-shot path: whole (C, N*L) problem resident in VMEM."""
    tile_t = out_ref.shape[-1]
    idx = jax.lax.broadcasted_iota(jnp.int32, (1, tile_t), 1)
    pos = idx % stride                                            # position within sample
    rows = _conv_rows(x_ref, w_ref, pos,
                      c_in=c_in, c_out=c_out, l_real=l_real, tile_t=tile_t)
    valid = jnp.logical_and(pos < l_real, idx < n_valid)          # real (non-pad) lanes

    for o in range(c_out):
        r = rows[o]
        rm = jnp.where(valid, r, 0.0)
        mean = jnp.sum(rm, axis=(0, 1), keepdims=True) * inv_count          # (1, 1)
        cen = jnp.where(valid, r - mean, 0.0)
        var = jnp.sum(cen * cen, axis=(0, 1), keepdims=True) * inv_count    # exact 2-pass var
        scale = gamma_ref[o] * jax.lax.rsqrt(var + BN_EPS)
        shift = beta_ref[o] - mean * scale
        y = jnp.maximum(r * scale + shift, 0.0)                   # BN affine + ReLU
        # Dropout(p=0.0) is the identity.
        # TODO(synk): dropout_p > 0 would need pltpu.prng_seed / prng_random_bits.
        if is_res_con:
            y = y + x_ref[pl.ds(o, 1), :].astype(jnp.float32)     # residual
        out_ref[pl.ds(o, 1), :] = y.astype(out_ref.dtype)


def _tiled_kernel(w_ref, gamma_ref, beta_ref, x_ref, out_ref, sum_ref, sq_ref, *,
                  c_in, c_out, stride, l_real, inv_count, is_res_con):
    """Two-pass path for inputs too large for VMEM (pass 0 stats, pass 1 write)."""
    p = pl.program_id(0)          # 0 = statistics pass, 1 = normalize/write pass
    t = pl.program_id(1)          # lane tile (whole samples)
    tile_t = out_ref.shape[-1]
    idx = jax.lax.broadcasted_iota(jnp.int32, (1, tile_t), 1)
    pos = idx % stride
    rows = _conv_rows(x_ref, w_ref, pos,
                      c_in=c_in, c_out=c_out, l_real=l_real, tile_t=tile_t)
    valid = pos < l_real          # per-sample pad lanes excluded from stats

    @pl.when(jnp.logical_and(p == 0, t == 0))
    def _init_stats():
        sum_ref[...] = jnp.zeros_like(sum_ref)
        sq_ref[...] = jnp.zeros_like(sq_ref)

    @pl.when(p == 0)
    def _accumulate_stats():
        # Single-pass f32 sum / sum-of-squares accumulation.
        # TODO(synk): mean-shifted / Welford accumulation if N*L grows large
        #             enough for E[x^2]-E[x]^2 cancellation to matter.
        for o in range(c_out):
            rm = jnp.where(valid, rows[o], 0.0)
            sum_ref[pl.ds(o, 1), :] += jnp.sum(rm, axis=1, keepdims=True)
            sq_ref[pl.ds(o, 1), :] += jnp.sum(rm * rm, axis=1, keepdims=True)
        # Write a defined value so a never-written VMEM output block can never be
        # flushed. During pass 0 the output block index is pinned to 0, so no HBM
        # writeback normally happens here; even if the scheduler flushed every
        # step, pass 1 rewrites every block last, so final HBM contents stay
        # correct.
        out_ref[...] = jnp.zeros_like(out_ref)

    @pl.when(p == 1)
    def _normalize_and_write():
        mean = sum_ref[...] * inv_count                           # (c_out, 1)
        var = sq_ref[...] * inv_count - mean * mean
        inv_std = jax.lax.rsqrt(var + BN_EPS)
        for o in range(c_out):
            scale = gamma_ref[o] * inv_std[o:o + 1, :]            # (1, 1)
            shift = beta_ref[o] - mean[o:o + 1, :] * scale
            y = jnp.maximum(rows[o] * scale + shift, 0.0)
            if is_res_con:
                y = y + x_ref[pl.ds(o, 1), :].astype(jnp.float32)
            out_ref[pl.ds(o, 1), :] = y.astype(out_ref.dtype)


def _vmem_limit_bytes():
    # Generation-aware: v7x only has 64 MiB physical VMEM per TensorCore.
    # ~55% of physical leaves room for double-buffered blocks + compiler scratch.
    try:
        cap = int(pltpu.get_tpu_info().vmem_capacity_bytes)
    except Exception:
        cap = 128 * 1024 * 1024
    return int(cap * 0.55)


def _working_set_bytes(c_in, c_out, lanes):
    # x block + out block (x2 for pipeline buffers) + c_out f32 accumulator rows
    # + a handful of temporaries (xi / tap / pos / mask), all f32.
    return 4 * lanes * (2 * (c_in + c_out) + c_out + 4)


def rescnn1d_forward(x, w, gamma, beta, *, force_tiled=False, tile_samples=None):
    """x: (N, C_in, L) f32; w: (C_out, C_in, 5); gamma/beta: (C_out,)."""
    n, c_in, l = x.shape
    c_out = w.shape[0]
    is_res_con = (c_in == c_out)

    w_flat = w.reshape(-1).astype(jnp.float32)
    gamma1 = gamma.reshape(-1).astype(jnp.float32)
    beta1 = beta.reshape(-1).astype(jnp.float32)

    vmem_limit = _vmem_limit_bytes()
    budget = int(0.8 * vmem_limit)
    inv_count = 1.0 / float(n * l)

    # Lane-dense layout: batch folded into the lane axis -> (C, N*L).
    # TODO(synk): optional bf16 I/O (keep f32 accumulation) would halve HBM bytes.
    x_cnl = jnp.transpose(x, (1, 0, 2))                           # (C, N, L)

    nl = n * l
    t_fast = _round_up(nl, LANE)
    use_fast = (not force_tiled) and _working_set_bytes(c_in, c_out, t_fast) <= budget

    if use_fast:
        # ---- single-shot fast path: everything VMEM-resident --------------------
        x2d = x_cnl.reshape(c_in, nl)
        if t_fast > nl:
            x2d = jnp.pad(x2d, ((0, 0), (0, t_fast - nl)))
        kernel = functools.partial(
            _fast_kernel, c_in=c_in, c_out=c_out, stride=l, l_real=l,
            n_valid=nl, inv_count=inv_count, is_res_con=is_res_con)
        out2d = pl.pallas_call(
            kernel,
            out_shape=jax.ShapeDtypeStruct((c_out, t_fast), x.dtype),
            grid_spec=pltpu.PrefetchScalarGridSpec(
                num_scalar_prefetch=0,
                grid=(1,),
                in_specs=[
                    pl.BlockSpec(memory_space=pltpu.MemorySpace.SMEM),   # conv weight
                    pl.BlockSpec(memory_space=pltpu.MemorySpace.SMEM),   # gamma
                    pl.BlockSpec(memory_space=pltpu.MemorySpace.SMEM),   # beta
                    pl.BlockSpec((c_in, t_fast), lambda i: (0, 0)),      # x (whole)
                ],
                out_specs=pl.BlockSpec((c_out, t_fast), lambda i: (0, 0)),
            ),
            compiler_params=pltpu.CompilerParams(
                dimension_semantics=("arbitrary",),
                vmem_limit_bytes=vmem_limit),
        )(w_flat, gamma1, beta1, x2d)
        out = out2d[:, :nl].reshape(c_out, n, l)
        return jnp.transpose(out, (1, 0, 2)).astype(x.dtype)

    # ---- tiled two-pass fallback (large N*L) ------------------------------------
    # Tiles are whole samples; per-sample length padded to a multiple of 128 so
    # lane blocks satisfy the (8,128) rule and stay lane-dense.
    l_pad = _round_up(l, LANE)
    stride = l_pad
    if l_pad > l:
        x_cnl = jnp.pad(x_cnl, ((0, 0), (0, 0), (0, l_pad - l)))
    x2d = x_cnl.reshape(c_in, n * l_pad)

    if tile_samples is not None:
        n_blk = tile_samples
    else:
        n_blk = 1
        for cand in range(1, n + 1):
            if n % cand == 0 and _working_set_bytes(c_in, c_out, cand * l_pad) <= budget:
                n_blk = cand
    assert n % n_blk == 0
    n_tiles = n // n_blk
    tile_t = n_blk * l_pad

    kernel = functools.partial(
        _tiled_kernel, c_in=c_in, c_out=c_out, stride=stride, l_real=l,
        inv_count=inv_count, is_res_con=is_res_con)

    out2d = pl.pallas_call(
        kernel,
        out_shape=jax.ShapeDtypeStruct((c_out, n * l_pad), x.dtype),
        grid_spec=pltpu.PrefetchScalarGridSpec(
            num_scalar_prefetch=0,
            grid=(2, n_tiles),                     # (pass, lane tile); pass outermost
            in_specs=[
                pl.BlockSpec(memory_space=pltpu.MemorySpace.SMEM),       # conv weight
                pl.BlockSpec(memory_space=pltpu.MemorySpace.SMEM),       # gamma
                pl.BlockSpec(memory_space=pltpu.MemorySpace.SMEM),       # beta
                pl.BlockSpec((c_in, tile_t), lambda p, t: (0, t)),       # x tile
            ],
            # Pass 0 pins the output block index to 0 (stats only, no real
            # writeback); pass 1 walks the tiles and its writes are the last
            # ones to every HBM block.
            out_specs=pl.BlockSpec((c_out, tile_t), lambda p, t: (0, t * p)),
            scratch_shapes=[
                pltpu.VMEM((c_out, 1), jnp.float32),   # per-channel running sum
                pltpu.VMEM((c_out, 1), jnp.float32),   # per-channel running sumsq
            ],
        ),
        # Both axes sequential: pass axis orders stats -> normalize, tile axis
        # accumulates into shared scratch.
        # TODO(synk): per-core partial stats + combine would let the tile axis be
        #             "parallel" across v7x's two TensorCores.
        compiler_params=pltpu.CompilerParams(
            dimension_semantics=("arbitrary", "arbitrary"),
            vmem_limit_bytes=vmem_limit),
    )(w_flat, gamma1, beta1, x2d)

    out = out2d.reshape(c_out, n, l_pad)[:, :, :l]
    return jnp.transpose(out, (1, 0, 2)).astype(x.dtype)


def _reference(x, w, gamma, beta):
    """Plain-JAX reference of the PyTorch forward (training-mode BN, p=0 dropout)."""
    n, c_in, l = x.shape
    c_out = w.shape[0]
    x_pad = jnp.pad(x, ((0, 0), (0, 0), (PAD, PAD)))
    conv = jnp.zeros((n, c_out, l), jnp.float32)
    for k in range(KSIZE):
        conv = conv + jnp.einsum("oi,nil->nol", w[:, :, k], x_pad[:, :, k:k + l])
    mean = jnp.mean(conv, axis=(0, 2), keepdims=True)
    var = jnp.mean((conv - mean) ** 2, axis=(0, 2), keepdims=True)
    y = gamma.reshape(1, -1, 1) * (conv - mean) * jax.lax.rsqrt(var + BN_EPS) \
        + beta.reshape(1, -1, 1)
    y = jnp.maximum(y, 0.0)
    if c_in == c_out:
        y = y + x
    return y


if __name__ == "__main__":
    key = jax.random.PRNGKey(0)
    k1, k2, k3, k4, k5, k6 = jax.random.split(key, 6)

    # Test 1: residual case (in_channel == out_channel == 4), batch=2, length=16.
    # Dispatches to the single-shot VMEM-resident fast path.
    N, C, L = 2, 4, 16
    x = jax.random.normal(k1, (N, C, L), dtype=jnp.float32)
    w = 0.1 * jax.random.normal(k2, (C, C, KSIZE), dtype=jnp.float32)
    gamma = 1.0 + 0.1 * jax.random.normal(k3, (C,), dtype=jnp.float32)
    beta = 0.1 * jax.random.normal(k4, (C,), dtype=jnp.float32)

    out = jax.block_until_ready(rescnn1d_forward(x, w, gamma, beta))
    ref = _reference(x, w, gamma, beta)
    assert out.shape == (N, C, L)
    assert jnp.allclose(out, ref, atol=1e-4, rtol=1e-4), "fast path mismatch"

    # Test 2: non-residual case (C_in=4 != C_out=6), forced through the tiled
    # two-pass path (grid=(2, 2)) to exercise the large-input code path.
    N2, CI2, CO2, L2 = 4, 4, 6, 48
    x2 = jax.random.normal(k5, (N2, CI2, L2), dtype=jnp.float32)
    w2 = 0.1 * jax.random.normal(k6, (CO2, CI2, KSIZE), dtype=jnp.float32)
    gamma2 = jnp.ones((CO2,), jnp.float32)
    beta2 = jnp.zeros((CO2,), jnp.float32)

    out2 = jax.block_until_ready(
        rescnn1d_forward(x2, w2, gamma2, beta2, force_tiled=True, tile_samples=2))
    ref2 = _reference(x2, w2, gamma2, beta2)
    assert out2.shape == (N2, CO2, L2)
    assert jnp.allclose(out2, ref2, atol=1e-4, rtol=1e-4), "tiled path mismatch"

    print("KERNEL_OK")
</pallas_src>

<mosaic_0001>
module attributes {stable_mosaic.version = 11 : i64} {
  func.func @_fast_kernel(%arg0: i32, %arg1: memref<80xf32, #tpu.memory_space<smem>>, %arg2: memref<4xf32, #tpu.memory_space<smem>>, %arg3: memref<4xf32, #tpu.memory_space<smem>>, %arg4: memref<4x128xf32, #tpu.memory_space<vmem>>, %arg5: memref<4x128xf32, #tpu.memory_space<vmem>>) attributes {dimension_semantics = [#tpu.dimension_semantics<arbitrary>], iteration_bounds = array<i64: 1>, scalar_prefetch = 0 : i64, scratch_operands = 0 : i64, tpu.core_type = #tpu.core_type<tc>, window_params = [{transform_indices = @transform_0, window_bounds = array<i64: 80>}, {transform_indices = @transform_1, window_bounds = array<i64: 4>}, {transform_indices = @transform_2, window_bounds = array<i64: 4>}, {pipeline_mode = #tpu.pipeline_mode<synchronous>, transform_indices = @transform_3, window_bounds = array<i64: 4, 128>}, {pipeline_mode = #tpu.pipeline_mode<synchronous>, transform_indices = @transform_4, window_bounds = array<i64: 4, 128>}]} {
    %0 = tpu.iota {dimensions = array<i32: 1>} : vector<1x128xi32>
    %c16_i32 = arith.constant 16 : i32
    %c0_i32 = arith.constant 0 : i32
    %1 = arith.cmpi eq, %c16_i32, %c0_i32 : i32
    %c1_i32 = arith.constant 1 : i32
    %2 = arith.select %1, %c1_i32, %c16_i32 : i32
    %3 = vector.broadcast %2 : i32 to vector<1x128xi32>
    %4 = arith.remsi %0, %3 : vector<1x128xi32>
    %c0_i32_0 = arith.constant 0 : i32
    %5 = vector.broadcast %c0_i32_0 : i32 to vector<1x128xi32>
    %6 = arith.cmpi ne, %4, %5 : vector<1x128xi32>
    %c0_i32_1 = arith.constant 0 : i32
    %7 = vector.broadcast %c0_i32_1 : i32 to vector<1x128xi32>
    %8 = arith.cmpi slt, %4, %7 : vector<1x128xi32>
    %c0_i32_2 = arith.constant 0 : i32
    %9 = arith.cmpi slt, %2, %c0_i32_2 : i32
    %10 = vector.broadcast %9 : i1 to vector<1x128xi1>
    %11 = vector.broadcast %10 : vector<1x128xi1> to vector<1x128xi1>
    %12 = arith.xori %8, %11 : vector<1x128xi1>
    %13 = arith.andi %12, %6 : vector<1x128xi1>
    %14 = vector.broadcast %2 : i32 to vector<1x128xi32>
    %15 = arith.addi %4, %14 : vector<1x128xi32>
    %16 = arith.select %13, %15, %4 : vector<1x128xi1>, vector<1x128xi32>
    %cst = arith.constant 0.000000e+00 : f32
    %17 = vector.broadcast %cst : f32 to vector<1x128xf32>
    %cst_3 = arith.constant 0.000000e+00 : f32
    %18 = vector.broadcast %cst_3 : f32 to vector<1x128xf32>
    %cst_4 = arith.constant 0.000000e+00 : f32
    %19 = vector.broadcast %cst_4 : f32 to vector<1x128xf32>
    %cst_5 = arith.constant 0.000000e+00 : f32
    %20 = vector.broadcast %cst_5 : f32 to vector<1x128xf32>
    %c0 = arith.constant 0 : index
    %c0_6 = arith.constant 0 : index
    %21 = vector.load %arg4[%c0, %c0_6] : memref<4x128xf32, #tpu.memory_space<vmem>>, vector<1x128xf32>
    %c2_i32 = arith.constant 2 : i32
    %22 = tpu.dynamic_rotate %21 by %c2_i32 dim 1 : vector<1x128xf32>, i32 -> vector<1x128xf32>
    %c2_i32_7 = arith.constant 2 : i32
    %23 = vector.broadcast %c2_i32_7 : i32 to vector<1x128xi32>
    %24 = arith.cmpi sge, %16, %23 : vector<1x128xi32>
    %cst_8 = arith.constant 0.000000e+00 : f32
    %25 = vector.broadcast %cst_8 : f32 to vector<1x128xf32>
    %26 = arith.select %24, %22, %25 : vector<1x128xi1>, vector<1x128xf32>
    %c0_9 = arith.constant 0 : index
    %27 = memref.load %arg1[%c0_9] : memref<80xf32, #tpu.memory_space<smem>>
    %28 = vector.broadcast %27 : f32 to vector<1x128xf32>
    %29 = arith.mulf %28, %26 : vector<1x128xf32>
    %30 = arith.addf %17, %29 : vector<1x128xf32>
    %c20 = arith.constant 20 : index
    %31 = memref.load %arg1[%c20] : memref<80xf32, #tpu.memory_space<smem>>
    %32 = vector.broadcast %31 : f32 to vector<1x128xf32>
    %33 = arith.mulf %32, %26 : vector<1x128xf32>
    %34 = arith.addf %18, %33 : vector<1x128xf32>
    %c40 = arith.constant 40 : index
    %35 = memref.load %arg1[%c40] : memref<80xf32, #tpu.memory_space<smem>>
    %36 = vector.broadcast %35 : f32 to vector<1x128xf32>
    %37 = arith.mulf %36, %26 : vector<1x128xf32>
    %38 = arith.addf %19, %37 : vector<1x128xf32>
    %c60 = arith.constant 60 : index
    %39 = memref.load %arg1[%c60] : memref<80xf32, #tpu.memory_space<smem>>
    %40 = vector.broadcast %39 : f32 to vector<1x128xf32>
    %41 = arith.mulf %40, %26 : vector<1x128xf32>
    %42 = arith.addf %20, %41 : vector<1x128xf32>
    %c1_i32_10 = arith.constant 1 : i32
    %43 = tpu.dynamic_rotate %21 by %c1_i32_10 dim 1 : vector<1x128xf32>, i32 -> vector<1x128xf32>
    %c1_i32_11 = arith.constant 1 : i32
    %44 = vector.broadcast %c1_i32_11 : i32 to vector<1x128xi32>
    %45 = arith.cmpi sge, %16, %44 : vector<1x128xi32>
    %cst_12 = arith.constant 0.000000e+00 : f32
    %46 = vector.broadcast %cst_12 : f32 to vector<1x128xf32>
    %47 = arith.select %45, %43, %46 : vector<1x128xi1>, vector<1x128xf32>
    %c1 = arith.constant 1 : index
    %48 = memref.load %arg1[%c1] : memref<80xf32, #tpu.memory_space<smem>>
    %49 = vector.broadcast %48 : f32 to vector<1x128xf32>
    %50 = arith.mulf %49, %47 : vector<1x128xf32>
    %51 = arith.addf %30, %50 : vector<1x128xf32>
    %c21 = arith.constant 21 : index
    %52 = memref.load %arg1[%c21] : memref<80xf32, #tpu.memory_space<smem>>
    %53 = vector.broadcast %52 : f32 to vector<1x128xf32>
    %54 = arith.mulf %53, %47 : vector<1x128xf32>
    %55 = arith.addf %34, %54 : vector<1x128xf32>
    %c41 = arith.constant 41 : index
    %56 = memref.load %arg1[%c41] : memref<80xf32, #tpu.memory_space<smem>>
    %57 = vector.broadcast %56 : f32 to vector<1x128xf32>
    %58 = arith.mulf %57, %47 : vector<1x128xf32>
    %59 = arith.addf %38, %58 : vector<1x128xf32>
    %c61 = arith.constant 61 : index
    %60 = memref.load %arg1[%c61] : memref<80xf32, #tpu.memory_space<smem>>
    %61 = vector.broadcast %60 : f32 to vector<1x128xf32>
    %62 = arith.mulf %61, %47 : vector<1x128xf32>
    %63 = arith.addf %42, %62 : vector<1x128xf32>
    %c2 = arith.constant 2 : index
    %64 = memref.load %arg1[%c2] : memref<80xf32, #tpu.memory_space<smem>>
    %65 = vector.broadcast %64 : f32 to vector<1x128xf32>
    %66 = arith.mulf %65, %21 : vector<1x128xf32>
    %67 = arith.addf %51, %66 : vector<1x128xf32>
    %c22 = arith.constant 22 : index
    %68 = memref.load %arg1[%c22] : memref<80xf32, #tpu.memory_space<smem>>
    %69 = vector.broadcast %68 : f32 to vector<1x128xf32>
    %70 = arith.mulf %69, %21 : vector<1x128xf32>
    %71 = arith.addf %55, %70 : vector<1x128xf32>
    %c42 = arith.constant 42 : index
    %72 = memref.load %arg1[%c42] : memref<80xf32, #tpu.memory_space<smem>>
    %73 = vector.broadcast %72 : f32 to vector<1x128xf32>
    %74 = arith.mulf %73, %21 : vector<1x128xf32>
    %75 = arith.addf %59, %74 : vector<1x128xf32>
    %c62 = arith.constant 62 : index
    %76 = memref.load %arg1[%c62] : memref<80xf32, #tpu.memory_space<smem>>
    %77 = vector.broadcast %76 : f32 to vector<1x128xf32>
    %78 = arith.mulf %77, %21 : vector<1x128xf32>
    %79 = arith.addf %63, %78 : vector<1x128xf32>
    %c127_i32 = arith.constant 127 : i32
    %80 = tpu.dynamic_rotate %21 by %c127_i32 dim 1 : vector<1x128xf32>, i32 -> vector<1x128xf32>
    %c15_i32 = arith.constant 15 : i32
    %81 = vector.broadcast %c15_i32 : i32 to vector<1x128xi32>
    %82 = arith.cmpi slt, %16, %81 : vector<1x128xi32>
    %cst_13 = arith.constant 0.000000e+00 : f32
    %83 = vector.broadcast %cst_13 : f32 to vector<1x128xf32>
    %84 = arith.select %82, %80, %83 : vector<1x128xi1>, vector<1x128xf32>
    %c3 = arith.constant 3 : index
    %85 = memref.load %arg1[%c3] : memref<80xf32, #tpu.memory_space<smem>>
    %86 = vector.broadcast %85 : f32 to vector<1x128xf32>
    %87 = arith.mulf %86, %84 : vector<1x128xf32>
    %88 = arith.addf %67, %87 : vector<1x128xf32>
    %c23 = arith.constant 23 : index
    %89 = memref.load %arg1[%c23] : memref<80xf32, #tpu.memory_space<smem>>
    %90 = vector.broadcast %89 : f32 to vector<1x128xf32>
    %91 = arith.mulf %90, %84 : vector<1x128xf32>
    %92 = arith.addf %71, %91 : vector<1x128xf32>
    %c43 = arith.constant 43 : index
    %93 = memref.load %arg1[%c43] : memref<80xf32, #tpu.memory_space<smem>>
    %94 = vector.broadcast %93 : f32 to vector<1x128xf32>
    %95 = arith.mulf %94, %84 : vector<1x128xf32>
    %96 = arith.addf %75, %95 : vector<1x128xf32>
    %c63 = arith.constant 63 : index
    %97 = memref.load %arg1[%c63] : memref<80xf32, #tpu.memory_space<smem>>
    %98 = vector.broadcast %97 : f32 to vector<1x128xf32>
    %99 = arith.mulf %98, %84 : vector<1x128xf32>
    %100 = arith.addf %79, %99 : vector<1x128xf32>
    %c126_i32 = arith.constant 126 : i32
    %101 = tpu.dynamic_rotate %21 by %c126_i32 dim 1 : vector<1x128xf32>, i32 -> vector<1x128xf32>
    %c14_i32 = arith.constant 14 : i32
    %102 = vector.broadcast %c14_i32 : i32 to vector<1x128xi32>
    %103 = arith.cmpi slt, %16, %102 : vector<1x128xi32>
    %cst_14 = arith.constant 0.000000e+00 : f32
    %104 = vector.broadcast %cst_14 : f32 to vector<1x128xf32>
    %105 = arith.select %103, %101, %104 : vector<1x128xi1>, vector<1x128xf32>
    %c4 = arith.constant 4 : index
    %106 = memref.load %arg1[%c4] : memref<80xf32, #tpu.memory_space<smem>>
    %107 = vector.broadcast %106 : f32 to vector<1x128xf32>
    %108 = arith.mulf %107, %105 : vector<1x128xf32>
    %109 = arith.addf %88, %108 : vector<1x128xf32>
    %c24 = arith.constant 24 : index
    %110 = memref.load %arg1[%c24] : memref<80xf32, #tpu.memory_space<smem>>
    %111 = vector.broadcast %110 : f32 to vector<1x128xf32>
    %112 = arith.mulf %111, %105 : vector<1x128xf32>
    %113 = arith.addf %92, %112 : vector<1x128xf32>
    %c44 = arith.constant 44 : index
    %114 = memref.load %arg1[%c44] : memref<80xf32, #tpu.memory_space<smem>>
    %115 = vector.broadcast %114 : f32 to vector<1x128xf32>
    %116 = arith.mulf %115, %105 : vector<1x128xf32>
    %117 = arith.addf %96, %116 : vector<1x128xf32>
    %c64 = arith.constant 64 : index
    %118 = memref.load %arg1[%c64] : memref<80xf32, #tpu.memory_space<smem>>
    %119 = vector.broadcast %118 : f32 to vector<1x128xf32>
    %120 = arith.mulf %119, %105 : vector<1x128xf32>
    %121 = arith.addf %100, %120 : vector<1x128xf32>
    %c1_15 = arith.constant 1 : index
    %c0_16 = arith.constant 0 : index
    %122 = vector.load %arg4[%c1_15, %c0_16] : memref<4x128xf32, #tpu.memory_space<vmem>>, vector<1x128xf32>
    %c2_i32_17 = arith.constant 2 : i32
    %123 = tpu.dynamic_rotate %122 by %c2_i32_17 dim 1 : vector<1x128xf32>, i32 -> vector<1x128xf32>
    %c2_i32_18 = arith.constant 2 : i32
    %124 = vector.broadcast %c2_i32_18 : i32 to vector<1x128xi32>
    %125 = arith.cmpi sge, %16, %124 : vector<1x128xi32>
    %cst_19 = arith.constant 0.000000e+00 : f32
    %126 = vector.broadcast %cst_19 : f32 to vector<1x128xf32>
    %127 = arith.select %125, %123, %126 : vector<1x128xi1>, vector<1x128xf32>
    %c5 = arith.constant 5 : index
    %128 = memref.load %arg1[%c5] : memref<80xf32, #tpu.memory_space<smem>>
    %129 = vector.broadcast %128 : f32 to vector<1x128xf32>
    %130 = arith.mulf %129, %127 : vector<1x128xf32>
    %131 = arith.addf %109, %130 : vector<1x128xf32>
    %c25 = arith.constant 25 : index
    %132 = memref.load %arg1[%c25] : memref<80xf32, #tpu.memory_space<smem>>
    %133 = vector.broadcast %132 : f32 to vector<1x128xf32>
    %134 = arith.mulf %133, %127 : vector<1x128xf32>
    %135 = arith.addf %113, %134 : vector<1x128xf32>
    %c45 = arith.constant 45 : index
    %136 = memref.load %arg1[%c45] : memref<80xf32, #tpu.memory_space<smem>>
    %137 = vector.broadcast %136 : f32 to vector<1x128xf32>
    %138 = arith.mulf %137, %127 : vector<1x128xf32>
    %139 = arith.addf %117, %138 : vector<1x128xf32>
    %c65 = arith.constant 65 : index
    %140 = memref.load %arg1[%c65] : memref<80xf32, #tpu.memory_space<smem>>
    %141 = vector.broadcast %140 : f32 to vector<1x128xf32>
    %142 = arith.mulf %141, %127 : vector<1x128xf32>
    %143 = arith.addf %121, %142 : vector<1x128xf32>
    %c1_i32_20 = arith.constant 1 : i32
    %144 = tpu.dynamic_rotate %122 by %c1_i32_20 dim 1 : vector<1x128xf32>, i32 -> vector<1x128xf32>
    %c1_i32_21 = arith.constant 1 : i32
    %145 = vector.broadcast %c1_i32_21 : i32 to vector<1x128xi32>
    %146 = arith.cmpi sge, %16, %145 : vector<1x128xi32>
    %cst_22 = arith.constant 0.000000e+00 : f32
    %147 = vector.broadcast %cst_22 : f32 to vector<1x128xf32>
    %148 = arith.select %146, %144, %147 : vector<1x128xi1>, vector<1x128xf32>
    %c6 = arith.constant 6 : index
    %149 = memref.load %arg1[%c6] : memref<80xf32, #tpu.memory_space<smem>>
    %150 = vector.broadcast %149 : f32 to vector<1x128xf32>
    %151 = arith.mulf %150, %148 : vector<1x128xf32>
    %152 = arith.addf %131, %151 : vector<1x128xf32>
    %c26 = arith.constant 26 : index
    %153 = memref.load %arg1[%c26] : memref<80xf32, #tpu.memory_space<smem>>
    %154 = vector.broadcast %153 : f32 to vector<1x128xf32>
    %155 = arith.mulf %154, %148 : vector<1x128xf32>
    %156 = arith.addf %135, %155 : vector<1x128xf32>
    %c46 = arith.constant 46 : index
    %157 = memref.load %arg1[%c46] : memref<80xf32, #tpu.memory_space<smem>>
    %158 = vector.broadcast %157 : f32 to vector<1x128xf32>
    %159 = arith.mulf %158, %148 : vector<1x128xf32>
    %160 = arith.addf %139, %159 : vector<1x128xf32>
    %c66 = arith.constant 66 : index
    %161 = memref.load %arg1[%c66] : memref<80xf32, #tpu.memory_space<smem>>
    %162 = vector.broadcast %161 : f32 to vector<1x128xf32>
    %163 = arith.mulf %162, %148 : vector<1x128xf32>
    %164 = arith.addf %143, %163 : vector<1x128xf32>
    %c7 = arith.constant 7 : index
    %165 = memref.load %arg1[%c7] : memref<80xf32, #tpu.memory_space<smem>>
    %166 = vector.broadcast %165 : f32 to vector<1x128xf32>
    %167 = arith.mulf %166, %122 : vector<1x128xf32>
    %168 = arith.addf %152, %167 : vector<1x128xf32>
    %c27 = arith.constant 27 : index
    %169 = memref.load %arg1[%c27] : memref<80xf32, #tpu.memory_space<smem>>
    %170 = vector.broadcast %169 : f32 to vector<1x128xf32>
    %171 = arith.mulf %170, %122 : vector<1x128xf32>
    %172 = arith.addf %156, %171 : vector<1x128xf32>
    %c47 = arith.constant 47 : index
    %173 = memref.load %arg1[%c47] : memref<80xf32, #tpu.memory_space<smem>>
    %174 = vector.broadcast %173 : f32 to vector<1x128xf32>
    %175 = arith.mulf %174, %122 : vector<1x128xf32>
    %176 = arith.addf %160, %175 : vector<1x128xf32>
    %c67 = arith.constant 67 : index
    %177 = memref.load %arg1[%c67] : memref<80xf32, #tpu.memory_space<smem>>
    %178 = vector.broadcast %177 : f32 to vector<1x128xf32>
    %179 = arith.mulf %178, %122 : vector<1x128xf32>
    %180 = arith.addf %164, %179 : vector<1x128xf32>
    %c127_i32_23 = arith.constant 127 : i32
    %181 = tpu.dynamic_rotate %122 by %c127_i32_23 dim 1 : vector<1x128xf32>, i32 -> vector<1x128xf32>
    %c15_i32_24 = arith.constant 15 : i32
    %182 = vector.broadcast %c15_i32_24 : i32 to vector<1x128xi32>
    %183 = arith.cmpi slt, %16, %182 : vector<1x128xi32>
    %cst_25 = arith.constant 0.000000e+00 : f32
    %184 = vector.broadcast %cst_25 : f32 to vector<1x128xf32>
    %185 = arith.select %183, %181, %184 : vector<1x128xi1>, vector<1x128xf32>
    %c8 = arith.constant 8 : index
    %186 = memref.load %arg1[%c8] : memref<80xf32, #tpu.memory_space<smem>>
    %187 = vector.broadcast %186 : f32 to vector<1x128xf32>
    %188 = arith.mulf %187, %185 : vector<1x128xf32>
    %189 = arith.addf %168, %188 : vector<1x128xf32>
    %c28 = arith.constant 28 : index
    %190 = memref.load %arg1[%c28] : memref<80xf32, #tpu.memory_space<smem>>
    %191 = vector.broadcast %190 : f32 to vector<1x128xf32>
    %192 = arith.mulf %191, %185 : vector<1x128xf32>
    %193 = arith.addf %172, %192 : vector<1x128xf32>
    %c48 = arith.constant 48 : index
    %194 = memref.load %arg1[%c48] : memref<80xf32, #tpu.memory_space<smem>>
    %195 = vector.broadcast %194 : f32 to vector<1x128xf32>
    %196 = arith.mulf %195, %185 : vector<1x128xf32>
    %197 = arith.addf %176, %196 : vector<1x128xf32>
    %c68 = arith.constant 68 : index
    %198 = memref.load %arg1[%c68] : memref<80xf32, #tpu.memory_space<smem>>
    %199 = vector.broadcast %198 : f32 to vector<1x128xf32>
    %200 = arith.mulf %199, %185 : vector<1x128xf32>
    %201 = arith.addf %180, %200 : vector<1x128xf32>
    %c126_i32_26 = arith.constant 126 : i32
    %202 = tpu.dynamic_rotate %122 by %c126_i32_26 dim 1 : vector<1x128xf32>, i32 -> vector<1x128xf32>
    %c14_i32_27 = arith.constant 14 : i32
    %203 = vector.broadcast %c14_i32_27 : i32 to vector<1x128xi32>
    %204 = arith.cmpi slt, %16, %203 : vector<1x128xi32>
    %cst_28 = arith.constant 0.000000e+00 : f32
    %205 = vector.broadcast %cst_28 : f32 to vector<1x128xf32>
    %206 = arith.select %204, %202, %205 : vector<1x128xi1>, vector<1x128xf32>
    %c9 = arith.constant 9 : index
    %207 = memref.load %arg1[%c9] : memref<80xf32, #tpu.memory_space<smem>>
    %208 = vector.broadcast %207 : f32 to vector<1x128xf32>
    %209 = arith.mulf %208, %206 : vector<1x128xf32>
    %210 = arith.addf %189, %209 : vector<1x128xf32>
    %c29 = arith.constant 29 : index
    %211 = memref.load %arg1[%c29] : memref<80xf32, #tpu.memory_space<smem>>
    %212 = vector.broadcast %211 : f32 to vector<1x128xf32>
    %213 = arith.mulf %212, %206 : vector<1x128xf32>
    %214 = arith.addf %193, %213 : vector<1x128xf32>
    %c49 = arith.constant 49 : index
    %215 = memref.load %arg1[%c49] : memref<80xf32, #tpu.memory_space<smem>>
    %216 = vector.broadcast %215 : f32 to vector<1x128xf32>
    %217 = arith.mulf %216, %206 : vector<1x128xf32>
    %218 = arith.addf %197, %217 : vector<1x128xf32>
    %c69 = arith.constant 69 : index
    %219 = memref.load %arg1[%c69] : memref<80xf32, #tpu.memory_space<smem>>
    %220 = vector.broadcast %219 : f32 to vector<1x128xf32>
    %221 = arith.mulf %220, %206 : vector<1x128xf32>
    %222 = arith.addf %201, %221 : vector<1x128xf32>
    %c2_29 = arith.constant 2 : index
    %c0_30 = arith.constant 0 : index
    %223 = vector.load %arg4[%c2_29, %c0_30] : memref<4x128xf32, #tpu.memory_space<vmem>>, vector<1x128xf32>
    %c2_i32_31 = arith.constant 2 : i32
    %224 = tpu.dynamic_rotate %223 by %c2_i32_31 dim 1 : vector<1x128xf32>, i32 -> vector<1x128xf32>
    %c2_i32_32 = arith.constant 2 : i32
    %225 = vector.broadcast %c2_i32_32 : i32 to vector<1x128xi32>
    %226 = arith.cmpi sge, %16, %225 : vector<1x128xi32>
    %cst_33 = arith.constant 0.000000e+00 : f32
    %227 = vector.broadcast %cst_33 : f32 to vector<1x128xf32>
    %228 = arith.select %226, %224, %227 : vector<1x128xi1>, vector<1x128xf32>
    %c10 = arith.constant 10 : index
    %229 = memref.load %arg1[%c10] : memref<80xf32, #tpu.memory_space<smem>>
    %230 = vector.broadcast %229 : f32 to vector<1x128xf32>
    %231 = arith.mulf %230, %228 : vector<1x128xf32>
    %232 = arith.addf %210, %231 : vector<1x128xf32>
    %c30 = arith.constant 30 : index
    %233 = memref.load %arg1[%c30] : memref<80xf32, #tpu.memory_space<smem>>
    %234 = vector.broadcast %233 : f32 to vector<1x128xf32>
    %235 = arith.mulf %234, %228 : vector<1x128xf32>
    %236 = arith.addf %214, %235 : vector<1x128xf32>
    %c50 = arith.constant 50 : index
    %237 = memref.load %arg1[%c50] : memref<80xf32, #tpu.memory_space<smem>>
    %238 = vector.broadcast %237 : f32 to vector<1x128xf32>
    %239 = arith.mulf %238, %228 : vector<1x128xf32>
    %240 = arith.addf %218, %239 : vector<1x128xf32>
    %c70 = arith.constant 70 : index
    %241 = memref.load %arg1[%c70] : memref<80xf32, #tpu.memory_space<smem>>
    %242 = vector.broadcast %241 : f32 to vector<1x128xf32>
    %243 = arith.mulf %242, %228 : vector<1x128xf32>
    %244 = arith.addf %222, %243 : vector<1x128xf32>
    %c1_i32_34 = arith.constant 1 : i32
    %245 = tpu.dynamic_rotate %223 by %c1_i32_34 dim 1 : vector<1x128xf32>, i32 -> vector<1x128xf32>
    %c1_i32_35 = arith.constant 1 : i32
    %246 = vector.broadcast %c1_i32_35 : i32 to vector<1x128xi32>
    %247 = arith.cmpi sge, %16, %246 : vector<1x128xi32>
    %cst_36 = arith.constant 0.000000e+00 : f32
    %248 = vector.broadcast %cst_36 : f32 to vector<1x128xf32>
    %249 = arith.select %247, %245, %248 : vector<1x128xi1>, vector<1x128xf32>
    %c11 = arith.constant 11 : index
    %250 = memref.load %arg1[%c11] : memref<80xf32, #tpu.memory_space<smem>>
    %251 = vector.broadcast %250 : f32 to vector<1x128xf32>
    %252 = arith.mulf %251, %249 : vector<1x128xf32>
    %253 = arith.addf %232, %252 : vector<1x128xf32>
    %c31 = arith.constant 31 : index
    %254 = memref.load %arg1[%c31] : memref<80xf32, #tpu.memory_space<smem>>
    %255 = vector.broadcast %254 : f32 to vector<1x128xf32>
    %256 = arith.mulf %255, %249 : vector<1x128xf32>
    %257 = arith.addf %236, %256 : vector<1x128xf32>
    %c51 = arith.constant 51 : index
    %258 = memref.load %arg1[%c51] : memref<80xf32, #tpu.memory_space<smem>>
    %259 = vector.broadcast %258 : f32 to vector<1x128xf32>
    %260 = arith.mulf %259, %249 : vector<1x128xf32>
    %261 = arith.addf %240, %260 : vector<1x128xf32>
    %c71 = arith.constant 71 : index
    %262 = memref.load %arg1[%c71] : memref<80xf32, #tpu.memory_space<smem>>
    %263 = vector.broadcast %262 : f32 to vector<1x128xf32>
    %264 = arith.mulf %263, %249 : vector<1x128xf32>
    %265 = arith.addf %244, %264 : vector<1x128xf32>
    %c12 = arith.constant 12 : index
    %266 = memref.load %arg1[%c12] : memref<80xf32, #tpu.memory_space<smem>>
    %267 = vector.broadcast %266 : f32 to vector<1x128xf32>
    %268 = arith.mulf %267, %223 : vector<1x128xf32>
    %269 = arith.addf %253, %268 : vector<1x128xf32>
    %c32 = arith.constant 32 : index
    %270 = memref.load %arg1[%c32] : memref<80xf32, #tpu.memory_space<smem>>
    %271 = vector.broadcast %270 : f32 to vector<1x128xf32>
    %272 = arith.mulf %271, %223 : vector<1x128xf32>
    %273 = arith.addf %257, %272 : vector<1x128xf32>
    %c52 = arith.constant 52 : index
    %274 = memref.load %arg1[%c52] : memref<80xf32, #tpu.memory_space<smem>>
    %275 = vector.broadcast %274 : f32 to vector<1x128xf32>
    %276 = arith.mulf %275, %223 : vector<1x128xf32>
    %277 = arith.addf %261, %276 : vector<1x128xf32>
    %c72 = arith.constant 72 : index
    %278 = memref.load %arg1[%c72] : memref<80xf32, #tpu.memory_space<smem>>
    %279 = vector.broadcast %278 : f32 to vector<1x128xf32>
    %280 = arith.mulf %279, %223 : vector<1x128xf32>
    %281 = arith.addf %265, %280 : vector<1x128xf32>
    %c127_i32_37 = arith.constant 127 : i32
    %282 = tpu.dynamic_rotate %223 by %c127_i32_37 dim 1 : vector<1x128xf32>, i32 -> vector<1x128xf32>
    %c15_i32_38 = arith.constant 15 : i32
    %283 = vector.broadcast %c15_i32_38 : i32 to vector<1x128xi32>
    %284 = arith.cmpi slt, %16, %283 : vector<1x128xi32>
    %cst_39 = arith.constant 0.000000e+00 : f32
    %285 = vector.broadcast %cst_39 : f32 to vector<1x128xf32>
    %286 = arith.select %284, %282, %285 : vector<1x128xi1>, vector<1x128xf32>
    %c13 = arith.constant 13 : index
    %287 = memref.load %arg1[%c13] : memref<80xf32, #tpu.memory_space<smem>>
    %288 = vector.broadcast %287 : f32 to vector<1x128xf32>
    %289 = arith.mulf %288, %286 : vector<1x128xf32>
    %290 = arith.addf %269, %289 : vector<1x128xf32>
    %c33 = arith.constant 33 : index
    %291 = memref.load %arg1[%c33] : memref<80xf32, #tpu.memory_space<smem>>
    %292 = vector.broadcast %291 : f32 to vector<1x128xf32>
    %293 = arith.mulf %292, %286 : vector<1x128xf32>
    %294 = arith.addf %273, %293 : vector<1x128xf32>
    %c53 = arith.constant 53 : index
    %295 = memref.load %arg1[%c53] : memref<80xf32, #tpu.memory_space<smem>>
    %296 = vector.broadcast %295 : f32 to vector<1x128xf32>
    %297 = arith.mulf %296, %286 : vector<1x128xf32>
    %298 = arith.addf %277, %297 : vector<1x128xf32>
    %c73 = arith.constant 73 : index
    %299 = memref.load %arg1[%c73] : memref<80xf32, #tpu.memory_space<smem>>
    %300 = vector.broadcast %299 : f32 to vector<1x128xf32>
    %301 = arith.mulf %300, %286 : vector<1x128xf32>
    %302 = arith.addf %281, %301 : vector<1x128xf32>
    %c126_i32_40 = arith.constant 126 : i32
    %303 = tpu.dynamic_rotate %223 by %c126_i32_40 dim 1 : vector<1x128xf32>, i32 -> vector<1x128xf32>
    %c14_i32_41 = arith.constant 14 : i32
    %304 = vector.broadcast %c14_i32_41 : i32 to vector<1x128xi32>
    %305 = arith.cmpi slt, %16, %304 : vector<1x128xi32>
    %cst_42 = arith.constant 0.000000e+00 : f32
    %306 = vector.broadcast %cst_42 : f32 to vector<1x128xf32>
    %307 = arith.select %305, %303, %306 : vector<1x128xi1>, vector<1x128xf32>
    %c14 = arith.constant 14 : index
    %308 = memref.load %arg1[%c14] : memref<80xf32, #tpu.memory_space<smem>>
    %309 = vector.broadcast %308 : f32 to vector<1x128xf32>
    %310 = arith.mulf %309, %307 : vector<1x128xf32>
    %311 = arith.addf %290, %310 : vector<1x128xf32>
    %c34 = arith.constant 34 : index
    %312 = memref.load %arg1[%c34] : memref<80xf32, #tpu.memory_space<smem>>
    %313 = vector.broadcast %312 : f32 to vector<1x128xf32>
    %314 = arith.mulf %313, %307 : vector<1x128xf32>
    %315 = arith.addf %294, %314 : vector<1x128xf32>
    %c54 = arith.constant 54 : index
    %316 = memref.load %arg1[%c54] : memref<80xf32, #tpu.memory_space<smem>>
    %317 = vector.broadcast %316 : f32 to vector<1x128xf32>
    %318 = arith.mulf %317, %307 : vector<1x128xf32>
    %319 = arith.addf %298, %318 : vector<1x128xf32>
    %c74 = arith.constant 74 : index
    %320 = memref.load %arg1[%c74] : memref<80xf32, #tpu.memory_space<smem>>
    %321 = vector.broadcast %320 : f32 to vector<1x128xf32>
    %322 = arith.mulf %321, %307 : vector<1x128xf32>
    %323 = arith.addf %302, %322 : vector<1x128xf32>
    %c3_43 = arith.constant 3 : index
    %c0_44 = arith.constant 0 : index
    %324 = vector.load %arg4[%c3_43, %c0_44] : memref<4x128xf32, #tpu.memory_space<vmem>>, vector<1x128xf32>
    %c2_i32_45 = arith.constant 2 : i32
    %325 = tpu.dynamic_rotate %324 by %c2_i32_45 dim 1 : vector<1x128xf32>, i32 -> vector<1x128xf32>
    %c2_i32_46 = arith.constant 2 : i32
    %326 = vector.broadcast %c2_i32_46 : i32 to vector<1x128xi32>
    %327 = arith.cmpi sge, %16, %326 : vector<1x128xi32>
    %cst_47 = arith.constant 0.000000e+00 : f32
    %328 = vector.broadcast %cst_47 : f32 to vector<1x128xf32>
    %329 = arith.select %327, %325, %328 : vector<1x128xi1>, vector<1x128xf32>
    %c15 = arith.constant 15 : index
    %330 = memref.load %arg1[%c15] : memref<80xf32, #tpu.memory_space<smem>>
    %331 = vector.broadcast %330 : f32 to vector<1x128xf32>
    %332 = arith.mulf %331, %329 : vector<1x128xf32>
    %333 = arith.addf %311, %332 : vector<1x128xf32>
    %c35 = arith.constant 35 : index
    %334 = memref.load %arg1[%c35] : memref<80xf32, #tpu.memory_space<smem>>
    %335 = vector.broadcast %334 : f32 to vector<1x128xf32>
    %336 = arith.mulf %335, %329 : vector<1x128xf32>
    %337 = arith.addf %315, %336 : vector<1x128xf32>
    %c55 = arith.constant 55 : index
    %338 = memref.load %arg1[%c55] : memref<80xf32, #tpu.memory_space<smem>>
    %339 = vector.broadcast %338 : f32 to vector<1x128xf32>
    %340 = arith.mulf %339, %329 : vector<1x128xf32>
    %341 = arith.addf %319, %340 : vector<1x128xf32>
    %c75 = arith.constant 75 : index
    %342 = memref.load %arg1[%c75] : memref<80xf32, #tpu.memory_space<smem>>
    %343 = vector.broadcast %342 : f32 to vector<1x128xf32>
    %344 = arith.mulf %343, %329 : vector<1x128xf32>
    %345 = arith.addf %323, %344 : vector<1x128xf32>
    %c1_i32_48 = arith.constant 1 : i32
    %346 = tpu.dynamic_rotate %324 by %c1_i32_48 dim 1 : vector<1x128xf32>, i32 -> vector<1x128xf32>
    %c1_i32_49 = arith.constant 1 : i32
    %347 = vector.broadcast %c1_i32_49 : i32 to vector<1x128xi32>
    %348 = arith.cmpi sge, %16, %347 : vector<1x128xi32>
    %cst_50 = arith.constant 0.000000e+00 : f32
    %349 = vector.broadcast %cst_50 : f32 to vector<1x128xf32>
    %350 = arith.select %348, %346, %349 : vector<1x128xi1>, vector<1x128xf32>
    %c16 = arith.constant 16 : index
    %351 = memref.load %arg1[%c16] : memref<80xf32, #tpu.memory_space<smem>>
    %352 = vector.broadcast %351 : f32 to vector<1x128xf32>
    %353 = arith.mulf %352, %350 : vector<1x128xf32>
    %354 = arith.addf %333, %353 : vector<1x128xf32>
    %c36 = arith.constant 36 : index
    %355 = memref.load %arg1[%c36] : memref<80xf32, #tpu.memory_space<smem>>
    %356 = vector.broadcast %355 : f32 to vector<1x128xf32>
    %357 = arith.mulf %356, %350 : vector<1x128xf32>
    %358 = arith.addf %337, %357 : vector<1x128xf32>
    %c56 = arith.constant 56 : index
    %359 = memref.load %arg1[%c56] : memref<80xf32, #tpu.memory_space<smem>>
    %360 = vector.broadcast %359 : f32 to vector<1x128xf32>
    %361 = arith.mulf %360, %350 : vector<1x128xf32>
    %362 = arith.addf %341, %361 : vector<1x128xf32>
    %c76 = arith.constant 76 : index
    %363 = memref.load %arg1[%c76] : memref<80xf32, #tpu.memory_space<smem>>
    %364 = vector.broadcast %363 : f32 to vector<1x128xf32>
    %365 = arith.mulf %364, %350 : vector<1x128xf32>
    %366 = arith.addf %345, %365 : vector<1x128xf32>
    %c17 = arith.constant 17 : index
    %367 = memref.load %arg1[%c17] : memref<80xf32, #tpu.memory_space<smem>>
    %368 = vector.broadcast %367 : f32 to vector<1x128xf32>
    %369 = arith.mulf %368, %324 : vector<1x128xf32>
    %370 = arith.addf %354, %369 : vector<1x128xf32>
    %c37 = arith.constant 37 : index
    %371 = memref.load %arg1[%c37] : memref<80xf32, #tpu.memory_space<smem>>
    %372 = vector.broadcast %371 : f32 to vector<1x128xf32>
    %373 = arith.mulf %372, %324 : vector<1x128xf32>
    %374 = arith.addf %358, %373 : vector<1x128xf32>
    %c57 = arith.constant 57 : index
    %375 = memref.load %arg1[%c57] : memref<80xf32, #tpu.memory_space<smem>>
    %376 = vector.broadcast %375 : f32 to vector<1x128xf32>
    %377 = arith.mulf %376, %324 : vector<1x128xf32>
    %378 = arith.addf %362, %377 : vector<1x128xf32>
    %c77 = arith.constant 77 : index
    %379 = memref.load %arg1[%c77] : memref<80xf32, #tpu.memory_space<smem>>
    %380 = vector.broadcast %379 : f32 to vector<1x128xf32>
    %381 = arith.mulf %380, %324 : vector<1x128xf32>
    %382 = arith.addf %366, %381 : vector<1x128xf32>
    %c127_i32_51 = arith.constant 127 : i32
    %383 = tpu.dynamic_rotate %324 by %c127_i32_51 dim 1 : vector<1x128xf32>, i32 -> vector<1x128xf32>
    %c15_i32_52 = arith.constant 15 : i32
    %384 = vector.broadcast %c15_i32_52 : i32 to vector<1x128xi32>
    %385 = arith.cmpi slt, %16, %384 : vector<1x128xi32>
    %cst_53 = arith.constant 0.000000e+00 : f32
    %386 = vector.broadcast %cst_53 : f32 to vector<1x128xf32>
    %387 = arith.select %385, %383, %386 : vector<1x128xi1>, vector<1x128xf32>
    %c18 = arith.constant 18 : index
    %388 = memref.load %arg1[%c18] : memref<80xf32, #tpu.memory_space<smem>>
    %389 = vector.broadcast %388 : f32 to vector<1x128xf32>
    %390 = arith.mulf %389, %387 : vector<1x128xf32>
    %391 = arith.addf %370, %390 : vector<1x128xf32>
    %c38 = arith.constant 38 : index
    %392 = memref.load %arg1[%c38] : memref<80xf32, #tpu.memory_space<smem>>
    %393 = vector.broadcast %392 : f32 to vector<1x128xf32>
    %394 = arith.mulf %393, %387 : vector<1x128xf32>
    %395 = arith.addf %374, %394 : vector<1x128xf32>
    %c58 = arith.constant 58 : index
    %396 = memref.load %arg1[%c58] : memref<80xf32, #tpu.memory_space<smem>>
    %397 = vector.broadcast %396 : f32 to vector<1x128xf32>
    %398 = arith.mulf %397, %387 : vector<1x128xf32>
    %399 = arith.addf %378, %398 : vector<1x128xf32>
    %c78 = arith.constant 78 : index
    %400 = memref.load %arg1[%c78] : memref<80xf32, #tpu.memory_space<smem>>
    %401 = vector.broadcast %400 : f32 to vector<1x128xf32>
    %402 = arith.mulf %401, %387 : vector<1x128xf32>
    %403 = arith.addf %382, %402 : vector<1x128xf32>
    %c126_i32_54 = arith.constant 126 : i32
    %404 = tpu.dynamic_rotate %324 by %c126_i32_54 dim 1 : vector<1x128xf32>, i32 -> vector<1x128xf32>
    %c14_i32_55 = arith.constant 14 : i32
    %405 = vector.broadcast %c14_i32_55 : i32 to vector<1x128xi32>
    %406 = arith.cmpi slt, %16, %405 : vector<1x128xi32>
    %cst_56 = arith.constant 0.000000e+00 : f32
    %407 = vector.broadcast %cst_56 : f32 to vector<1x128xf32>
    %408 = arith.select %406, %404, %407 : vector<1x128xi1>, vector<1x128xf32>
    %c19 = arith.constant 19 : index
    %409 = memref.load %arg1[%c19] : memref<80xf32, #tpu.memory_space<smem>>
    %410 = vector.broadcast %409 : f32 to vector<1x128xf32>
    %411 = arith.mulf %410, %408 : vector<1x128xf32>
    %412 = arith.addf %391, %411 : vector<1x128xf32>
    %c39 = arith.constant 39 : index
    %413 = memref.load %arg1[%c39] : memref<80xf32, #tpu.memory_space<smem>>
    %414 = vector.broadcast %413 : f32 to vector<1x128xf32>
    %415 = arith.mulf %414, %408 : vector<1x128xf32>
    %416 = arith.addf %395, %415 : vector<1x128xf32>
    %c59 = arith.constant 59 : index
    %417 = memref.load %arg1[%c59] : memref<80xf32, #tpu.memory_space<smem>>
    %418 = vector.broadcast %417 : f32 to vector<1x128xf32>
    %419 = arith.mulf %418, %408 : vector<1x128xf32>
    %420 = arith.addf %399, %419 : vector<1x128xf32>
    %c79 = arith.constant 79 : index
    %421 = memref.load %arg1[%c79] : memref<80xf32, #tpu.memory_space<smem>>
    %422 = vector.broadcast %421 : f32 to vector<1x128xf32>
    %423 = arith.mulf %422, %408 : vector<1x128xf32>
    %424 = arith.addf %403, %423 : vector<1x128xf32>
    %c16_i32_57 = arith.constant 16 : i32
    %425 = vector.broadcast %c16_i32_57 : i32 to vector<1x128xi32>
    %426 = arith.cmpi slt, %16, %425 : vector<1x128xi32>
    %c32_i32 = arith.constant 32 : i32
    %427 = vector.broadcast %c32_i32 : i32 to vector<1x128xi32>
    %428 = arith.cmpi slt, %0, %427 : vector<1x128xi32>
    %429 = arith.andi %426, %428 : vector<1x128xi1>
    %cst_58 = arith.constant 0.000000e+00 : f32
    %430 = vector.broadcast %cst_58 : f32 to vector<1x128xf32>
    %431 = arith.select %429, %412, %430 : vector<1x128xi1>, vector<1x128xf32>
    %432 = vector.shape_cast %431 : vector<1x128xf32> to vector<1x1x128xf32>
    %cst_59 = arith.constant dense<0.000000e+00> : vector<1xf32>
    %433 = vector.multi_reduction <add>, %432, %cst_59 [1, 2] : vector<1x1x128xf32> to vector<1xf32>
    %434 = vector.shape_cast %433 : vector<1xf32> to vector<1x1x1xf32>
    %435 = vector.extract %434[0, 0, 0] : f32 from vector<1x1x1xf32>
    %436 = vector.broadcast %435 : f32 to vector<1x1xf32>
    %cst_60 = arith.constant 3.125000e-02 : f32
    %437 = vector.broadcast %cst_60 : f32 to vector<1x1xf32>
    %438 = arith.mulf %436, %437 : vector<1x1xf32>
    %439 = vector.broadcast %438 : vector<1x1xf32> to vector<1x128xf32>
    %440 = arith.subf %412, %439 : vector<1x128xf32>
    %cst_61 = arith.constant 0.000000e+00 : f32
    %441 = vector.broadcast %cst_61 : f32 to vector<1x128xf32>
    %442 = arith.select %429, %440, %441 : vector<1x128xi1>, vector<1x128xf32>
    %443 = arith.mulf %442, %442 : vector<1x128xf32>
    %444 = vector.shape_cast %443 : vector<1x128xf32> to vector<1x1x128xf32>
    %cst_62 = arith.constant dense<0.000000e+00> : vector<1xf32>
    %445 = vector.multi_reduction <add>, %444, %cst_62 [1, 2] : vector<1x1x128xf32> to vector<1xf32>
    %446 = vector.shape_cast %445 : vector<1xf32> to vector<1x1x1xf32>
    %447 = vector.extract %446[0, 0, 0] : f32 from vector<1x1x1xf32>
    %448 = vector.broadcast %447 : f32 to vector<1x1xf32>
    %cst_63 = arith.constant 3.125000e-02 : f32
    %449 = vector.broadcast %cst_63 : f32 to vector<1x1xf32>
    %450 = arith.mulf %448, %449 : vector<1x1xf32>
    %c0_64 = arith.constant 0 : index
    %451 = memref.load %arg2[%c0_64] : memref<4xf32, #tpu.memory_space<smem>>
    %cst_65 = arith.constant 9.99999974E-6 : f32
    %452 = vector.broadcast %cst_65 : f32 to vector<1x1xf32>
    %453 = arith.addf %450, %452 : vector<1x1xf32>
    %454 = math.rsqrt %453 : vector<1x1xf32>
    %455 = vector.broadcast %451 : f32 to vector<1x1xf32>
    %456 = arith.mulf %455, %454 : vector<1x1xf32>
    %c0_66 = arith.constant 0 : index
    %457 = memref.load %arg3[%c0_66] : memref<4xf32, #tpu.memory_space<smem>>
    %458 = arith.mulf %438, %456 : vector<1x1xf32>
    %459 = vector.broadcast %457 : f32 to vector<1x1xf32>
    %460 = arith.subf %459, %458 : vector<1x1xf32>
    %461 = vector.broadcast %456 : vector<1x1xf32> to vector<1x128xf32>
    %462 = arith.mulf %412, %461 : vector<1x128xf32>
    %463 = vector.broadcast %460 : vector<1x1xf32> to vector<1x128xf32>
    %464 = arith.addf %462, %463 : vector<1x128xf32>
    %cst_67 = arith.constant 0.000000e+00 : f32
    %465 = vector.broadcast %cst_67 : f32 to vector<1x128xf32>
    %466 = arith.maximumf %464, %465 : vector<1x128xf32>
    %c0_68 = arith.constant 0 : index
    %c0_69 = arith.constant 0 : index
    %467 = vector.load %arg4[%c0_68, %c0_69] : memref<4x128xf32, #tpu.memory_space<vmem>>, vector<1x128xf32>
    %468 = arith.addf %466, %467 : vector<1x128xf32>
    %c0_70 = arith.constant 0 : index
    %c0_71 = arith.constant 0 : index
    %469 = vector.load %arg5[%c0_70, %c0_71] : memref<4x128xf32, #tpu.memory_space<vmem>>, vector<1x128xf32>
    tpu.vector_store %arg5[%c0_70, %c0_71], %468 {strides = array<i32>} : memref<4x128xf32, #tpu.memory_space<vmem>>, vector<1x128xf32>,
    %cst_72 = arith.constant 0.000000e+00 : f32
    %470 = vector.broadcast %cst_72 : f32 to vector<1x128xf32>
    %471 = arith.select %429, %416, %470 : vector<1x128xi1>, vector<1x128xf32>
    %472 = vector.shape_cast %471 : vector<1x128xf32> to vector<1x1x128xf32>
    %cst_73 = arith.constant dense<0.000000e+00> : vector<1xf32>
    %473 = vector.multi_reduction <add>, %472, %cst_73 [1, 2] : vector<1x1x128xf32> to vector<1xf32>
    %474 = vector.shape_cast %473 : vector<1xf32> to vector<1x1x1xf32>
    %475 = vector.extract %474[0, 0, 0] : f32 from vector<1x1x1xf32>
    %476 = vector.broadcast %475 : f32 to vector<1x1xf32>
    %cst_74 = arith.constant 3.125000e-02 : f32
    %477 = vector.broadcast %cst_74 : f32 to vector<1x1xf32>
    %478 = arith.mulf %476, %477 : vector<1x1xf32>
    %479 = vector.broadcast %478 : vector<1x1xf32> to vector<1x128xf32>
    %480 = arith.subf %416, %479 : vector<1x128xf32>
    %cst_75 = arith.constant 0.000000e+00 : f32
    %481 = vector.broadcast %cst_75 : f32 to vector<1x128xf32>
    %482 = arith.select %429, %480, %481 : vector<1x128xi1>, vector<1x128xf32>
    %483 = arith.mulf %482, %482 : vector<1x128xf32>
    %484 = vector.shape_cast %483 : vector<1x128xf32> to vector<1x1x128xf32>
    %cst_76 = arith.constant dense<0.000000e+00> : vector<1xf32>
    %485 = vector.multi_reduction <add>, %484, %cst_76 [1, 2] : vector<1x1x128xf32> to vector<1xf32>
    %486 = vector.shape_cast %485 : vector<1xf32> to vector<1x1x1xf32>
    %487 = vector.extract %486[0, 0, 0] : f32 from vector<1x1x1xf32>
    %488 = vector.broadcast %487 : f32 to vector<1x1xf32>
    %cst_77 = arith.constant 3.125000e-02 : f32
    %489 = vector.broadcast %cst_77 : f32 to vector<1x1xf32>
    %490 = arith.mulf %488, %489 : vector<1x1xf32>
    %c1_78 = arith.constant 1 : index
    %491 = memref.load %arg2[%c1_78] : memref<4xf32, #tpu.memory_space<smem>>
    %cst_79 = arith.constant 9.99999974E-6 : f32
    %492 = vector.broadcast %cst_79 : f32 to vector<1x1xf32>
    %493 = arith.addf %490, %492 : vector<1x1xf32>
    %494 = math.rsqrt %493 : vector<1x1xf32>
    %495 = vector.broadcast %491 : f32 to vector<1x1xf32>
    %496 = arith.mulf %495, %494 : vector<1x1xf32>
    %c1_80 = arith.constant 1 : index
    %497 = memref.load %arg3[%c1_80] : memref<4xf32, #tpu.memory_space<smem>>
    %498 = arith.mulf %478, %496 : vector<1x1xf32>
    %499 = vector.broadcast %497 : f32 to vector<1x1xf32>
    %500 = arith.subf %499, %498 : vector<1x1xf32>
    %501 = vector.broadcast %496 : vector<1x1xf32> to vector<1x128xf32>
    %502 = arith.mulf %416, %501 : vector<1x128xf32>
    %503 = vector.broadcast %500 : vector<1x1xf32> to vector<1x128xf32>
    %504 = arith.addf %502, %503 : vector<1x128xf32>
    %cst_81 = arith.constant 0.000000e+00 : f32
    %505 = vector.broadcast %cst_81 : f32 to vector<1x128xf32>
    %506 = arith.maximumf %504, %505 : vector<1x128xf32>
    %c1_82 = arith.constant 1 : index
    %c0_83 = arith.constant 0 : index
    %507 = vector.load %arg4[%c1_82, %c0_83] : memref<4x128xf32, #tpu.memory_space<vmem>>, vector<1x128xf32>
    %508 = arith.addf %506, %507 : vector<1x128xf32>
    %c1_84 = arith.constant 1 : index
    %c0_85 = arith.constant 0 : index
    %509 = vector.load %arg5[%c1_84, %c0_85] : memref<4x128xf32, #tpu.memory_space<vmem>>, vector<1x128xf32>
    tpu.vector_store %arg5[%c1_84, %c0_85], %508 {strides = array<i32>} : memref<4x128xf32, #tpu.memory_space<vmem>>, vector<1x128xf32>,
    %cst_86 = arith.constant 0.000000e+00 : f32
    %510 = vector.broadcast %cst_86 : f32 to vector<1x128xf32>
    %511 = arith.select %429, %420, %510 : vector<1x128xi1>, vector<1x128xf32>
    %512 = vector.shape_cast %511 : vector<1x128xf32> to vector<1x1x128xf32>
    %cst_87 = arith.constant dense<0.000000e+00> : vector<1xf32>
    %513 = vector.multi_reduction <add>, %512, %cst_87 [1, 2] : vector<1x1x128xf32> to vector<1xf32>
    %514 = vector.shape_cast %513 : vector<1xf32> to vector<1x1x1xf32>
    %515 = vector.extract %514[0, 0, 0] : f32 from vector<1x1x1xf32>
    %516 = vector.broadcast %515 : f32 to vector<1x1xf32>
    %cst_88 = arith.constant 3.125000e-02 : f32
    %517 = vector.broadcast %cst_88 : f32 to vector<1x1xf32>
    %518 = arith.mulf %516, %517 : vector<1x1xf32>
    %519 = vector.broadcast %518 : vector<1x1xf32> to vector<1x128xf32>
    %520 = arith.subf %420, %519 : vector<1x128xf32>
    %cst_89 = arith.constant 0.000000e+00 : f32
    %521 = vector.broadcast %cst_89 : f32 to vector<1x128xf32>
    %522 = arith.select %429, %520, %521 : vector<1x128xi1>, vector<1x128xf32>
    %523 = arith.mulf %522, %522 : vector<1x128xf32>
    %524 = vector.shape_cast %523 : vector<1x128xf32> to vector<1x1x128xf32>
    %cst_90 = arith.constant dense<0.000000e+00> : vector<1xf32>
    %525 = vector.multi_reduction <add>, %524, %cst_90 [1, 2] : vector<1x1x128xf32> to vector<1xf32>
    %526 = vector.shape_cast %525 : vector<1xf32> to vector<1x1x1xf32>
    %527 = vector.extract %526[0, 0, 0] : f32 from vector<1x1x1xf32>
    %528 = vector.broadcast %527 : f32 to vector<1x1xf32>
    %cst_91 = arith.constant 3.125000e-02 : f32
    %529 = vector.broadcast %cst_91 : f32 to vector<1x1xf32>
    %530 = arith.mulf %528, %529 : vector<1x1xf32>
    %c2_92 = arith.constant 2 : index
    %531 = memref.load %arg2[%c2_92] : memref<4xf32, #tpu.memory_space<smem>>
    %cst_93 = arith.constant 9.99999974E-6 : f32
    %532 = vector.broadcast %cst_93 : f32 to vector<1x1xf32>
    %533 = arith.addf %530, %532 : vector<1x1xf32>
    %534 = math.rsqrt %533 : vector<1x1xf32>
    %535 = vector.broadcast %531 : f32 to vector<1x1xf32>
    %536 = arith.mulf %535, %534 : vector<1x1xf32>
    %c2_94 = arith.constant 2 : index
    %537 = memref.load %arg3[%c2_94] : memref<4xf32, #tpu.memory_space<smem>>
    %538 = arith.mulf %518, %536 : vector<1x1xf32>
    %539 = vector.broadcast %537 : f32 to vector<1x1xf32>
    %540 = arith.subf %539, %538 : vector<1x1xf32>
    %541 = vector.broadcast %536 : vector<1x1xf32> to vector<1x128xf32>
    %542 = arith.mulf %420, %541 : vector<1x128xf32>
    %543 = vector.broadcast %540 : vector<1x1xf32> to vector<1x128xf32>
    %544 = arith.addf %542, %543 : vector<1x128xf32>
    %cst_95 = arith.constant 0.000000e+00 : f32
    %545 = vector.broadcast %cst_95 : f32 to vector<1x128xf32>
    %546 = arith.maximumf %544, %545 : vector<1x128xf32>
    %c2_96 = arith.constant 2 : index
    %c0_97 = arith.constant 0 : index
    %547 = vector.load %arg4[%c2_96, %c0_97] : memref<4x128xf32, #tpu.memory_space<vmem>>, vector<1x128xf32>
    %548 = arith.addf %546, %547 : vector<1x128xf32>
    %c2_98 = arith.constant 2 : index
    %c0_99 = arith.constant 0 : index
    %549 = vector.load %arg5[%c2_98, %c0_99] : memref<4x128xf32, #tpu.memory_space<vmem>>, vector<1x128xf32>
    tpu.vector_store %arg5[%c2_98, %c0_99], %548 {strides = array<i32>} : memref<4x128xf32, #tpu.memory_space<vmem>>, vector<1x128xf32>,
    %cst_100 = arith.constant 0.000000e+00 : f32
    %550 = vector.broadcast %cst_100 : f32 to vector<1x128xf32>
    %551 = arith.select %429, %424, %550 : vector<1x128xi1>, vector<1x128xf32>
    %552 = vector.shape_cast %551 : vector<1x128xf32> to vector<1x1x128xf32>
    %cst_101 = arith.constant dense<0.000000e+00> : vector<1xf32>
    %553 = vector.multi_reduction <add>, %552, %cst_101 [1, 2] : vector<1x1x128xf32> to vector<1xf32>
    %554 = vector.shape_cast %553 : vector<1xf32> to vector<1x1x1xf32>
    %555 = vector.extract %554[0, 0, 0] : f32 from vector<1x1x1xf32>
    %556 = vector.broadcast %555 : f32 to vector<1x1xf32>
    %cst_102 = arith.constant 3.125000e-02 : f32
    %557 = vector.broadcast %cst_102 : f32 to vector<1x1xf32>
    %558 = arith.mulf %556, %557 : vector<1x1xf32>
    %559 = vector.broadcast %558 : vector<1x1xf32> to vector<1x128xf32>
    %560 = arith.subf %424, %559 : vector<1x128xf32>
    %cst_103 = arith.constant 0.000000e+00 : f32
    %561 = vector.broadcast %cst_103 : f32 to vector<1x128xf32>
    %562 = arith.select %429, %560, %561 : vector<1x128xi1>, vector<1x128xf32>
    %563 = arith.mulf %562, %562 : vector<1x128xf32>
    %564 = vector.shape_cast %563 : vector<1x128xf32> to vector<1x1x128xf32>
    %cst_104 = arith.constant dense<0.000000e+00> : vector<1xf32>
    %565 = vector.multi_reduction <add>, %564, %cst_104 [1, 2] : vector<1x1x128xf32> to vector<1xf32>
    %566 = vector.shape_cast %565 : vector<1xf32> to vector<1x1x1xf32>
    %567 = vector.extract %566[0, 0, 0] : f32 from vector<1x1x1xf32>
    %568 = vector.broadcast %567 : f32 to vector<1x1xf32>
    %cst_105 = arith.constant 3.125000e-02 : f32
    %569 = vector.broadcast %cst_105 : f32 to vector<1x1xf32>
    %570 = arith.mulf %568, %569 : vector<1x1xf32>
    %c3_106 = arith.constant 3 : index
    %571 = memref.load %arg2[%c3_106] : memref<4xf32, #tpu.memory_space<smem>>
    %cst_107 = arith.constant 9.99999974E-6 : f32
    %572 = vector.broadcast %cst_107 : f32 to vector<1x1xf32>
    %573 = arith.addf %570, %572 : vector<1x1xf32>
    %574 = math.rsqrt %573 : vector<1x1xf32>
    %575 = vector.broadcast %571 : f32 to vector<1x1xf32>
    %576 = arith.mulf %575, %574 : vector<1x1xf32>
    %c3_108 = arith.constant 3 : index
    %577 = memref.load %arg3[%c3_108] : memref<4xf32, #tpu.memory_space<smem>>
    %578 = arith.mulf %558, %576 : vector<1x1xf32>
    %579 = vector.broadcast %577 : f32 to vector<1x1xf32>
    %580 = arith.subf %579, %578 : vector<1x1xf32>
    %581 = vector.broadcast %576 : vector<1x1xf32> to vector<1x128xf32>
    %582 = arith.mulf %424, %581 : vector<1x128xf32>
    %583 = vector.broadcast %580 : vector<1x1xf32> to vector<1x128xf32>
    %584 = arith.addf %582, %583 : vector<1x128xf32>
    %cst_109 = arith.constant 0.000000e+00 : f32
    %585 = vector.broadcast %cst_109 : f32 to vector<1x128xf32>
    %586 = arith.maximumf %584, %585 : vector<1x128xf32>
    %c3_110 = arith.constant 3 : index
    %c0_111 = arith.constant 0 : index
    %587 = vector.load %arg4[%c3_110, %c0_111] : memref<4x128xf32, #tpu.memory_space<vmem>>, vector<1x128xf32>
    %588 = arith.addf %586, %587 : vector<1x128xf32>
    %c3_112 = arith.constant 3 : index
    %c0_113 = arith.constant 0 : index
    %589 = vector.load %arg5[%c3_112, %c0_113] : memref<4x128xf32, #tpu.memory_space<vmem>>, vector<1x128xf32>
    tpu.vector_store %arg5[%c3_112, %c0_113], %588 {strides = array<i32>} : memref<4x128xf32, #tpu.memory_space<vmem>>, vector<1x128xf32>,
    return
  }
  func.func @transform_0(%arg0: i32) -> i32 {
    %c0_i32 = arith.constant 0 : i32
    %c0_i32_0 = arith.constant 0 : i32
    return %c0_i32 : i32
  }
  func.func @transform_1(%arg0: i32) -> i32 {
    %c0_i32 = arith.constant 0 : i32
    %c0_i32_0 = arith.constant 0 : i32
    return %c0_i32 : i32
  }
  func.func @transform_2(%arg0: i32) -> i32 {
    %c0_i32 = arith.constant 0 : i32
    %c0_i32_0 = arith.constant 0 : i32
    return %c0_i32 : i32
  }
  func.func @transform_3(%arg0: i32) -> (i32, i32) {
    %c0_i32 = arith.constant 0 : i32
    %c0_i32_0 = arith.constant 0 : i32
    %c0_i32_1 = arith.constant 0 : i32
    return %c0_i32, %c0_i32_0 : i32, i32
  }
  func.func @transform_4(%arg0: i32) -> (i32, i32) {
    %c0_i32 = arith.constant 0 : i32
    %c0_i32_0 = arith.constant 0 : i32
    %c0_i32_1 = arith.constant 0 : i32
    return %c0_i32, %c0_i32_0 : i32, i32
  }
}

</mosaic_0001>

<llo_original>
// kernel: tpu_custom_call.1
$region0: #{tpu_custom_call.1}
  #allocation0 [shape = 'u32[]', space=smem, size = 0x4, offset = 0x4, fixed_abs, tag = 'smem constant byte address 0x4 - core index']
  #allocation1 [shape = 'u32[144,128]{1,0:T(1,128)}', space=vmem, size = 0x12000, scoped, tag = 'internal scratch']
  %s0 = inlined_call_operand.hbm [shape: f32[80], index: 0, kind: input, shape index: {}]
  %s1 = inlined_call_operand.hbm [shape: f32[4], index: 1, kind: input, shape index: {}]
  %s2 = inlined_call_operand.hbm [shape: f32[4], index: 2, kind: input, shape index: {}]
  %s3 = inlined_call_operand.hbm [shape: f32[4,128], index: 3, kind: input, shape index: {}]
  %s4 = inlined_call_operand.hbm [shape: f32[4,128], index: 4, kind: output, shape index: {}]
  %s5 = sld [smem:[#allocation0]]
  $region42: #{tpu_custom_call.1} parent=0
    _
  %s7 = ssub.s32 1, %s5
  %s8 = scalar_select 0, %s7, %s5
  $region1: #{tpu_custom_call.1} parent=0
    #allocation2 [shape = 'u8[512]{0}', space=smem, size = 0x200, scoped, tag = 'input window, operand 0, single buffered']
    #allocation3 [shape = 's32[1]{0}', space=sflag, size = 0x4, scoped, tag = 'scoped memory for tpu_custom_call.1']
    #allocation4 [shape = 's32[1]{0}', space=sflag, size = 0x4, scoped, tag = 'scoped memory for tpu_custom_call.1']
    #allocation5 [shape = 's32[1]{0}', space=sflag, size = 0x4, scoped, tag = 'scoped memory for tpu_custom_call.1']
    #allocation6 [shape = 'u8[512]{0}', space=smem, size = 0x200, scoped, tag = 'input window, operand 1, single buffered']
    #allocation7 [shape = 's32[1]{0}', space=sflag, size = 0x4, scoped, tag = 'scoped memory for tpu_custom_call.1']
    #allocation8 [shape = 'u8[512]{0}', space=smem, size = 0x200, scoped, tag = 'input window, operand 2, single buffered']
    #allocation9 [shape = 'u8[2048]{0}', space=vmem, size = 0x800, scoped, tag = 'input window, operand 3, single buffered']
    #allocation10 [shape = 'u8[2048]{0}', space=vmem, size = 0x800, scoped, tag = 'output window, operand 0, single buffered']
    %9 = vsyncpa [#allocation5], 0
    %10 = vsyncpa [#allocation7], 0
    %11 = vsyncpa [#allocation3], 0
    %12 = vsyncpa [#allocation4], 0
    // Predicated region
    $region2: #{tpu_custom_call.1} parent=1 // pred_check
      _
    $region3: #{tpu_custom_call.1} parent=1 // pred_check_branch
      %14 = sbr.rel (0) target = $region5
    $region4: #{tpu_custom_call.1} parent=1 // pred_region
      %s16 = ssub.s32 16, 16
      %17 = vsyncadd [#allocation5], %s16
      %20 = dma.hbm_to_smem %s0, 16, [#allocation2], [#allocation5]
    $region5: #{tpu_custom_call.1} parent=1 // pred_fallthru
      _
    // Predicated region
    $region6: #{tpu_custom_call.1} parent=1 // pred_check
      _
    $region7: #{tpu_custom_call.1} parent=1 // pred_check_branch
      %22 = sbr.rel (0) target = $region9
    $region8: #{tpu_custom_call.1} parent=1 // pred_region
      %s24 = ssub.s32 16, 16
      %25 = vsyncadd [#allocation7], %s24
      %28 = dma.hbm_to_smem %s1, 16, [#allocation6], [#allocation7]
    $region9: #{tpu_custom_call.1} parent=1 // pred_fallthru
      _
    // Predicated region
    $region10: #{tpu_custom_call.1} parent=1 // pred_check
      _
    $region11: #{tpu_custom_call.1} parent=1 // pred_check_branch
      %30 = sbr.rel (0) target = $region13
    $region12: #{tpu_custom_call.1} parent=1 // pred_region
      %s32 = ssub.s32 16, 16
      %33 = vsyncadd [#allocation7], %s32
      %36 = dma.hbm_to_smem %s2, 16, [#allocation8], [#allocation7]
    $region13: #{tpu_custom_call.1} parent=1 // pred_fallthru
      _
    // Predicated region
    $region14: #{tpu_custom_call.1} parent=1 // pred_check
      _
    $region15: #{tpu_custom_call.1} parent=1 // pred_check_branch
      %38 = sbr.rel (0) target = $region17
    $region16: #{tpu_custom_call.1} parent=1 // pred_region
      %s40 = ssub.s32 64, 64
      %41 = vsyncadd [#allocation3], %s40
      %s43 = sshll.u32 [#allocation9], 4
      %s44 = int_to_ptr.vmem [resolvable:$true] %s43
      %46 = dma.hbm_to_vmem [thread:$0]  %s3, 64, %s44, [#allocation3]
    $region17: #{tpu_custom_call.1} parent=1 // pred_fallthru
      _
    // Predicated region
    $region18: #{tpu_custom_call.1} parent=1 // pred_check
      _
    $region19: #{tpu_custom_call.1} parent=1 // pred_check_branch
      %48 = sbr.rel (0) target = $region21
    $region20: #{tpu_custom_call.1} parent=1 // pred_region
      %49 = dma.done [#allocation5], 16
    $region21: #{tpu_custom_call.1} parent=1 // pred_fallthru
      _
    // Predicated region
    $region22: #{tpu_custom_call.1} parent=1 // pred_check
      _
    $region23: #{tpu_custom_call.1} parent=1 // pred_check_branch
      %51 = sbr.rel (0) target = $region25
    $region24: #{tpu_custom_call.1} parent=1 // pred_region
      %52 = dma.done [#allocation7], 16
    $region25: #{tpu_custom_call.1} parent=1 // pred_fallthru
      _
    // Predicated region
    $region26: #{tpu_custom_call.1} parent=1 // pred_check
      _
    $region27: #{tpu_custom_call.1} parent=1 // pred_check_branch
      %54 = sbr.rel (0) target = $region29
    $region28: #{tpu_custom_call.1} parent=1 // pred_region
      %55 = dma.done [#allocation7], 16
    $region29: #{tpu_custom_call.1} parent=1 // pred_fallthru
      _
    // Predicated region
    $region30: #{tpu_custom_call.1} parent=1 // pred_check
      _
    $region31: #{tpu_custom_call.1} parent=1 // pred_check_branch
      %57 = sbr.rel (0) target = $region33
    $region32: #{tpu_custom_call.1} parent=1 // pred_region
      %58 = dma.done [#allocation3], 64
    $region33: #{tpu_custom_call.1} parent=1 // pred_fallthru
      _
    %59 = sfence
    %v60 = vlaneseq
    %v61 = vand.u32 %v60, 127
    %vm62 = vcmp.lt.s32.totalorder %v61, 0
    %v63 = vsub.s32 0, %v61
    %v64 = vsel %vm62, %v63, %v61
    %v65 = vshrl.u32 %v64, 4
    %v66 = vand.u32 %v64, 15
    %v67 = vsub.s32 0, %v66
    %v68 = vsel %vm62, %v67, %v66
    %vm69 = vcmp.ne.s32.totalorder %v68, 0
    %vm70 = vcmp.lt.s32.totalorder %v68, 0
    %vm71 = vmand %vm70, %vm69
    %v72 = vadd.s32 %v68, 16
    %v73 = vsel %vm71, %v72, %v68
    %v74 = vld [vmem:[#allocation9] sm:$0x1]
    %75 = vrot.lane.b32.xlu0 %v74, 2
    %v76 = vpop.permute.xlu0 %75
    %vm77 = vcmp.ge.s32.totalorder %v73, 2
    %v78 = vsel %vm77, %v76, 0.0
    %s79 = sld [smem:[#allocation2]]
    %v80 = vstv %s79
    %v81 = vmul.f32 %v80, %v78
    %v82 = vadd.f32 %v81, 0.0
    %s83 = sld [smem:[#allocation2 + $0x14]]
    %v84 = vstv %s83
    %v85 = vmul.f32 %v84, %v78
    %v86 = vadd.f32 %v85, 0.0
    %s87 = sld [smem:[#allocation2 + $0x28]]
    %v88 = vstv %s87
    %v89 = vmul.f32 %v88, %v78
    %v90 = vadd.f32 %v89, 0.0
    %s91 = sld [smem:[#allocation2 + $0x3c]]
    %v92 = vstv %s91
    %v93 = vmul.f32 %v92, %v78
    %v94 = vadd.f32 %v93, 0.0
    %95 = vrot.lane.b32.xlu0 %v74, 1
    %v96 = vpop.permute.xlu0 %95
    %vm97 = vcmp.ge.s32.totalorder %v73, 1
    %v98 = vsel %vm97, %v96, 0.0
    %s99 = sld [smem:[#allocation2 + $0x1]]
    %v100 = vstv %s99
    %v101 = vmul.f32 %v100, %v98
    %v102 = vadd.f32 %v82, %v101
    %s103 = sld [smem:[#allocation2 + $0x15]]
    %v104 = vstv %s103
    %v105 = vmul.f32 %v104, %v98
    %v106 = vadd.f32 %v86, %v105
    %s107 = sld [smem:[#allocation2 + $0x29]]
    %v108 = vstv %s107
    %v109 = vmul.f32 %v108, %v98
    %v110 = vadd.f32 %v90, %v109
    %s111 = sld [smem:[#allocation2 + $0x3d]]
    %v112 = vstv %s111
    %v113 = vmul.f32 %v112, %v98
    %v114 = vadd.f32 %v94, %v113
    %s115 = sld [smem:[#allocation2 + $0x2]]
    %v116 = vstv %s115
    %v117 = vmul.f32 %v116, %v74
    %v118 = vadd.f32 %v102, %v117
    %s119 = sld [smem:[#allocation2 + $0x16]]
    %v120 = vstv %s119
    %v121 = vmul.f32 %v120, %v74
    %v122 = vadd.f32 %v106, %v121
    %s123 = sld [smem:[#allocation2 + $0x2a]]
    %v124 = vstv %s123
    %v125 = vmul.f32 %v124, %v74
    %v126 = vadd.f32 %v110, %v125
    %s127 = sld [smem:[#allocation2 + $0x3e]]
    %v128 = vstv %s127
    %v129 = vmul.f32 %v128, %v74
    %v130 = vadd.f32 %v114, %v129
    %131 = vrot.lane.b32.xlu0 %v74, 127
    %v132 = vpop.permute.xlu0 %131
    %vm133 = vcmp.lt.s32.totalorder %v73, 15
    %v134 = vsel %vm133, %v132, 0.0
    %s135 = sld [smem:[#allocation2 + $0x3]]
    %v136 = vstv %s135
    %v137 = vmul.f32 %v136, %v134
    %v138 = vadd.f32 %v118, %v137
    %s139 = sld [smem:[#allocation2 + $0x17]]
    %v140 = vstv %s139
    %v141 = vmul.f32 %v140, %v134
    %v142 = vadd.f32 %v122, %v141
    %s143 = sld [smem:[#allocation2 + $0x2b]]
    %v144 = vstv %s143
    %v145 = vmul.f32 %v144, %v134
    %v146 = vadd.f32 %v126, %v145
    %s147 = sld [smem:[#allocation2 + $0x3f]]
    %v148 = vstv %s147
    %v149 = vmul.f32 %v148, %v134
    %v150 = vadd.f32 %v130, %v149
    %151 = vrot.lane.b32.xlu0 %v74, 126
    %v152 = vpop.permute.xlu0 %151
    %vm153 = vcmp.lt.s32.totalorder %v73, 14
    %v154 = vsel %vm153, %v152, 0.0
    %s155 = sld [smem:[#allocation2 + $0x4]]
    %v156 = vstv %s155
    %v157 = vmul.f32 %v156, %v154
    %v158 = vadd.f32 %v138, %v157
    %s159 = sld [smem:[#allocation2 + $0x18]]
    %v160 = vstv %s159
    %v161 = vmul.f32 %v160, %v154
    %v162 = vadd.f32 %v142, %v161
    %s163 = sld [smem:[#allocation2 + $0x2c]]
    %v164 = vstv %s163
    %v165 = vmul.f32 %v164, %v154
    %v166 = vadd.f32 %v146, %v165
    %s167 = sld [smem:[#allocation2 + $0x40]]
    %v168 = vstv %s167
    %v169 = vmul.f32 %v168, %v154
    %v170 = vadd.f32 %v150, %v169
    %v171 = vld [vmem:[#allocation9 + $0x1] sm:$0x1]
    %172 = vrot.lane.b32.xlu0 %v171, 2
    %v173 = vpop.permute.xlu0 %172
    %v174 = vsel %vm77, %v173, 0.0
    %s175 = sld [smem:[#allocation2 + $0x5]]
    %v176 = vstv %s175
    %v177 = vmul.f32 %v176, %v174
    %v178 = vadd.f32 %v158, %v177
    %s179 = sld [smem:[#allocation2 + $0x19]]
    %v180 = vstv %s179
    %v181 = vmul.f32 %v180, %v174
    %v182 = vadd.f32 %v162, %v181
    %s183 = sld [smem:[#allocation2 + $0x2d]]
    %v184 = vstv %s183
    %v185 = vmul.f32 %v184, %v174
    %v186 = vadd.f32 %v166, %v185
    %s187 = sld [smem:[#allocation2 + $0x41]]
    %v188 = vstv %s187
    %v189 = vmul.f32 %v188, %v174
    %v190 = vadd.f32 %v170, %v189
    %191 = vrot.lane.b32.xlu0 %v171, 1
    %v192 = vpop.permute.xlu0 %191
    %v193 = vsel %vm97, %v192, 0.0
    %s194 = sld [smem:[#allocation2 + $0x6]]
    %v195 = vstv %s194
    %v196 = vmul.f32 %v195, %v193
    %v197 = vadd.f32 %v178, %v196
    %s198 = sld [smem:[#allocation2 + $0x1a]]
    %v199 = vstv %s198
    %v200 = vmul.f32 %v199, %v193
    %v201 = vadd.f32 %v182, %v200
    %s202 = sld [smem:[#allocation2 + $0x2e]]
    %v203 = vstv %s202
    %v204 = vmul.f32 %v203, %v193
    %v205 = vadd.f32 %v186, %v204
    %s206 = sld [smem:[#allocation2 + $0x42]]
    %v207 = vstv %s206
    %v208 = vmul.f32 %v207, %v193
    %v209 = vadd.f32 %v190, %v208
    %s210 = sld [smem:[#allocation2 + $0x7]]
    %v211 = vstv %s210
    %v212 = vmul.f32 %v211, %v171
    %v213 = vadd.f32 %v197, %v212
    %s214 = sld [smem:[#allocation2 + $0x1b]]
    %v215 = vstv %s214
    %v216 = vmul.f32 %v215, %v171
    %v217 = vadd.f32 %v201, %v216
    %s218 = sld [smem:[#allocation2 + $0x2f]]
    %v219 = vstv %s218
    %v220 = vmul.f32 %v219, %v171
    %v221 = vadd.f32 %v205, %v220
    %s222 = sld [smem:[#allocation2 + $0x43]]
    %v223 = vstv %s222
    %v224 = vmul.f32 %v223, %v171
    %v225 = vadd.f32 %v209, %v224
    %226 = vrot.lane.b32.xlu0 %v171, 127
    %v227 = vpop.permute.xlu0 %226
    %v228 = vsel %vm133, %v227, 0.0
    %s229 = sld [smem:[#allocation2 + $0x8]]
    %v230 = vstv %s229
    %v231 = vmul.f32 %v230, %v228
    %v232 = vadd.f32 %v213, %v231
    %s233 = sld [smem:[#allocation2 + $0x1c]]
    %v234 = vstv %s233
    %v235 = vmul.f32 %v234, %v228
    %v236 = vadd.f32 %v217, %v235
    %s237 = sld [smem:[#allocation2 + $0x30]]
    %v238 = vstv %s237
    %v239 = vmul.f32 %v238, %v228
    %v240 = vadd.f32 %v221, %v239
    %s241 = sld [smem:[#allocation2 + $0x44]]
    %v242 = vstv %s241
    %v243 = vmul.f32 %v242, %v228
    %v244 = vadd.f32 %v225, %v243
    %245 = vrot.lane.b32.xlu0 %v171, 126
    %v246 = vpop.permute.xlu0 %245
    %v247 = vsel %vm153, %v246, 0.0
    %s248 = sld [smem:[#allocation2 + $0x9]]
    %v249 = vstv %s248
    %v250 = vmul.f32 %v249, %v247
    %v251 = vadd.f32 %v232, %v250
    %s252 = sld [smem:[#allocation2 + $0x1d]]
    %v253 = vstv %s252
    %v254 = vmul.f32 %v253, %v247
    %v255 = vadd.f32 %v236, %v254
    %s256 = sld [smem:[#allocation2 + $0x31]]
    %v257 = vstv %s256
    %v258 = vmul.f32 %v257, %v247
    %v259 = vadd.f32 %v240, %v258
    %s260 = sld [smem:[#allocation2 + $0x45]]
    %v261 = vstv %s260
    %v262 = vmul.f32 %v261, %v247
    %v263 = vadd.f32 %v244, %v262
    %v264 = vld [vmem:[#allocation9 + $0x2] sm:$0x1]
    %265 = vrot.lane.b32.xlu0 %v264, 2
    %v266 = vpop.permute.xlu0 %265
    %v267 = vsel %vm77, %v266, 0.0
    %s268 = sld [smem:[#allocation2 + $0xa]]
    %v269 = vstv %s268
    %v270 = vmul.f32 %v269, %v267
    %v271 = vadd.f32 %v251, %v270
    %s272 = sld [smem:[#allocation2 + $0x1e]]
    %v273 = vstv %s272
    %v274 = vmul.f32 %v273, %v267
    %v275 = vadd.f32 %v255, %v274
    %s276 = sld [smem:[#allocation2 + $0x32]]
    %v277 = vstv %s276
    %v278 = vmul.f32 %v277, %v267
    %v279 = vadd.f32 %v259, %v278
    %s280 = sld [smem:[#allocation2 + $0x46]]
    %v281 = vstv %s280
    %v282 = vmul.f32 %v281, %v267
    %v283 = vadd.f32 %v263, %v282
    %284 = vrot.lane.b32.xlu0 %v264, 1
    %v285 = vpop.permute.xlu0 %284
    %v286 = vsel %vm97, %v285, 0.0
    %s287 = sld [smem:[#allocation2 + $0xb]]
    %v288 = vstv %s287
    %v289 = vmul.f32 %v288, %v286
    %v290 = vadd.f32 %v271, %v289
    %s291 = sld [smem:[#allocation2 + $0x1f]]
    %v292 = vstv %s291
    %v293 = vmul.f32 %v292, %v286
    %v294 = vadd.f32 %v275, %v293
    %s295 = sld [smem:[#allocation2 + $0x33]]
    %v296 = vstv %s295
    %v297 = vmul.f32 %v296, %v286
    %v298 = vadd.f32 %v279, %v297
    %s299 = sld [smem:[#allocation2 + $0x47]]
    %v300 = vstv %s299
    %v301 = vmul.f32 %v300, %v286
    %v302 = vadd.f32 %v283, %v301
    %s303 = sld [smem:[#allocation2 + $0xc]]
    %v304 = vstv %s303
    %v305 = vmul.f32 %v304, %v264
    %v306 = vadd.f32 %v290, %v305
    %s307 = sld [smem:[#allocation2 + $0x20]]
    %v308 = vstv %s307
    %v309 = vmul.f32 %v308, %v264
    %v310 = vadd.f32 %v294, %v309
    %s311 = sld [smem:[#allocation2 + $0x34]]
    %v312 = vstv %s311
    %v313 = vmul.f32 %v312, %v264
    %v314 = vadd.f32 %v298, %v313
    %s315 = sld [smem:[#allocation2 + $0x48]]
    %v316 = vstv %s315
    %v317 = vmul.f32 %v316, %v264
    %v318 = vadd.f32 %v302, %v317
    %319 = vrot.lane.b32.xlu0 %v264, 127
    %v320 = vpop.permute.xlu0 %319
    %v321 = vsel %vm133, %v320, 0.0
    %s322 = sld [smem:[#allocation2 + $0xd]]
    %v323 = vstv %s322
    %v324 = vmul.f32 %v323, %v321
    %v325 = vadd.f32 %v306, %v324
    %s326 = sld [smem:[#allocation2 + $0x21]]
    %v327 = vstv %s326
    %v328 = vmul.f32 %v327, %v321
    %v329 = vadd.f32 %v310, %v328
    %s330 = sld [smem:[#allocation2 + $0x35]]
    %v331 = vstv %s330
    %v332 = vmul.f32 %v331, %v321
    %v333 = vadd.f32 %v314, %v332
    %s334 = sld [smem:[#allocation2 + $0x49]]
    %v335 = vstv %s334
    %v336 = vmul.f32 %v335, %v321
    %v337 = vadd.f32 %v318, %v336
    %338 = vrot.lane.b32.xlu0 %v264, 126
    %v339 = vpop.permute.xlu0 %338
    %v340 = vsel %vm153, %v339, 0.0
    %s341 = sld [smem:[#allocation2 + $0xe]]
    %v342 = vstv %s341
    %v343 = vmul.f32 %v342, %v340
    %v344 = vadd.f32 %v325, %v343
    %s345 = sld [smem:[#allocation2 + $0x22]]
    %v346 = vstv %s345
    %v347 = vmul.f32 %v346, %v340
    %v348 = vadd.f32 %v329, %v347
    %s349 = sld [smem:[#allocation2 + $0x36]]
    %v350 = vstv %s349
    %v351 = vmul.f32 %v350, %v340
    %v352 = vadd.f32 %v333, %v351
    %s353 = sld [smem:[#allocation2 + $0x4a]]
    %v354 = vstv %s353
    %v355 = vmul.f32 %v354, %v340
    %v356 = vadd.f32 %v337, %v355
    %v357 = vld [vmem:[#allocation9 + $0x3] sm:$0x1]
    %358 = vrot.lane.b32.xlu0 %v357, 2
    %v359 = vpop.permute.xlu0 %358
    %v360 = vsel %vm77, %v359, 0.0
    %s361 = sld [smem:[#allocation2 + $0xf]]
    %v362 = vstv %s361
    %v363 = vmul.f32 %v362, %v360
    %v364 = vadd.f32 %v344, %v363
    %s365 = sld [smem:[#allocation2 + $0x23]]
    %v366 = vstv %s365
    %v367 = vmul.f32 %v366, %v360
    %v368 = vadd.f32 %v348, %v367
    %s369 = sld [smem:[#allocation2 + $0x37]]
    %v370 = vstv %s369
    %v371 = vmul.f32 %v370, %v360
    %v372 = vadd.f32 %v352, %v371
    %s373 = sld [smem:[#allocation2 + $0x4b]]
    %v374 = vstv %s373
    %v375 = vmul.f32 %v374, %v360
    %v376 = vadd.f32 %v356, %v375
    %377 = vrot.lane.b32.xlu0 %v357, 1
    %v378 = vpop.permute.xlu0 %377
    %v379 = vsel %vm97, %v378, 0.0
    %s380 = sld [smem:[#allocation2 + $0x10]]
    %v381 = vstv %s380
    %v382 = vmul.f32 %v381, %v379
    %v383 = vadd.f32 %v364, %v382
    %s384 = sld [smem:[#allocation2 + $0x24]]
    %v385 = vstv %s384
    %v386 = vmul.f32 %v385, %v379
    %v387 = vadd.f32 %v368, %v386
    %s388 = sld [smem:[#allocation2 + $0x38]]
    %v389 = vstv %s388
    %v390 = vmul.f32 %v389, %v379
    %v391 = vadd.f32 %v372, %v390
    %s392 = sld [smem:[#allocation2 + $0x4c]]
    %v393 = vstv %s392
    %v394 = vmul.f32 %v393, %v379
    %v395 = vadd.f32 %v376, %v394
    %s396 = sld [smem:[#allocation2 + $0x11]]
    %v397 = vstv %s396
    %v398 = vmul.f32 %v397, %v357
    %v399 = vadd.f32 %v383, %v398
    %s400 = sld [smem:[#allocation2 + $0x25]]
    %v401 = vstv %s400
    %v402 = vmul.f32 %v401, %v357
    %v403 = vadd.f32 %v387, %v402
    %s404 = sld [smem:[#allocation2 + $0x39]]
    %v405 = vstv %s404
    %v406 = vmul.f32 %v405, %v357
    %v407 = vadd.f32 %v391, %v406
    %s408 = sld [smem:[#allocation2 + $0x4d]]
    %v409 = vstv %s408
    %v410 = vmul.f32 %v409, %v357
    %v411 = vadd.f32 %v395, %v410
    %412 = vrot.lane.b32.xlu0 %v357, 127
    %v413 = vpop.permute.xlu0 %412
    %v414 = vsel %vm133, %v413, 0.0
    %s415 = sld [smem:[#allocation2 + $0x12]]
    %v416 = vstv %s415
    %v417 = vmul.f32 %v416, %v414
    %v418 = vadd.f32 %v399, %v417
    %s419 = sld [smem:[#allocation2 + $0x26]]
    %v420 = vstv %s419
    %v421 = vmul.f32 %v420, %v414
    %v422 = vadd.f32 %v403, %v421
    %s423 = sld [smem:[#allocation2 + $0x3a]]
    %v424 = vstv %s423
    %v425 = vmul.f32 %v424, %v414
    %v426 = vadd.f32 %v407, %v425
    %s427 = sld [smem:[#allocation2 + $0x4e]]
    %v428 = vstv %s427
    %v429 = vmul.f32 %v428, %v414
    %v430 = vadd.f32 %v411, %v429
    %431 = vrot.lane.b32.xlu0 %v357, 126
    %v432 = vpop.permute.xlu0 %431
    %v433 = vsel %vm153, %v432, 0.0
    %s434 = sld [smem:[#allocation2 + $0x13]]
    %v435 = vstv %s434
    %v436 = vmul.f32 %v435, %v433
    %v437 = vadd.f32 %v418, %v436
    %s438 = sld [smem:[#allocation2 + $0x27]]
    %v439 = vstv %s438
    %v440 = vmul.f32 %v439, %v433
    %v441 = vadd.f32 %v422, %v440
    %s442 = sld [smem:[#allocation2 + $0x3b]]
    %v443 = vstv %s442
    %v444 = vmul.f32 %v443, %v433
    %v445 = vadd.f32 %v426, %v444
    %s446 = sld [smem:[#allocation2 + $0x4f]]
    %v447 = vstv %s446
    %v448 = vmul.f32 %v447, %v433
    %v449 = vadd.f32 %v430, %v448
    %vm450 = vcmp.lt.s32.totalorder %v73, 16
    %vm451 = vcmp.lt.s32.totalorder %v61, 32
    %vm452 = vmand %vm450, %vm451
    %v453 = vsel %vm452, %v437, 0.0
    %vm454 = vcmask 1040384
    %v455 = vsel %vm454, %v453, 0.0
    %456 = vadd.xlane.f32.xlu0 %v455
    %v457 = vpop.xlane.xlu0 %456
    %v458 = vrot.slane %v457, 4
    %v459 = vadd.f32 %v457, %v458
    %v460 = vrot.slane %v459, 2
    %v461 = vadd.f32 %v459, %v460
    %v462 = vrot.slane %v461, 1
    %v463 = vadd.f32 %v461, %v462
    %s464 = vtos %v463
    %v465 = vstv %s464
    %v466 = vmul.f32 %v465, 0.03125
    %v467 = vsub.f32 %v437, %v466
    %v468 = vsel %vm452, %v467, 0.0
    %v469 = vmul.f32 %v468, %v468
    %v470 = vsel %vm454, %v469, 0.0
    %471 = vadd.xlane.f32.xlu0 %v470
    %v472 = vpop.xlane.xlu0 %471
    %v473 = vrot.slane %v472, 4
    %v474 = vadd.f32 %v472, %v473
    %v475 = vrot.slane %v474, 2
    %v476 = vadd.f32 %v474, %v475
    %v477 = vrot.slane %v476, 1
    %v478 = vadd.f32 %v476, %v477
    %s479 = vtos %v478
    %v480 = vstv %s479
    %v481 = vmul.f32 %v480, 0.03125
    %s482 = sld [smem:[#allocation6]]
    %v483 = vadd.f32 %v481, 1e-05
    %v484 = vrsqrt.pop %v483
    %v485 = vstv %s482
    %v486 = vmul.f32 %v485, %v484
    %s487 = sld [smem:[#allocation8]]
    %v488 = vmul.f32 %v466, %v486
    %v489 = vstv %s487
    %v490 = vsub.f32 %v489, %v488
    %v491 = vmul.f32 %v437, %v486
    %v492 = vadd.f32 %v491, %v490
    %v493 = vmax.f32 %v492, 0.0
    %v494 = vadd.f32 %v493, %v74
    %495 = vst [vmem:[#allocation10] sm:$0x1] %v494
    %v496 = vsel %vm452, %v441, 0.0
    %v497 = vsel %vm454, %v496, 0.0
    %498 = vadd.xlane.f32.xlu0 %v497
    %v499 = vpop.xlane.xlu0 %498
    %v500 = vrot.slane %v499, 4
    %v501 = vadd.f32 %v499, %v500
    %v502 = vrot.slane %v501, 2
    %v503 = vadd.f32 %v501, %v502
    %v504 = vrot.slane %v503, 1
    %v505 = vadd.f32 %v503, %v504
    %s506 = vtos %v505
    %v507 = vstv %s506
    %v508 = vmul.f32 %v507, 0.03125
    %v509 = vsub.f32 %v441, %v508
    %v510 = vsel %vm452, %v509, 0.0
    %v511 = vmul.f32 %v510, %v510
    %v512 = vsel %vm454, %v511, 0.0
    %513 = vadd.xlane.f32.xlu0 %v512
    %v514 = vpop.xlane.xlu0 %513
    %v515 = vrot.slane %v514, 4
    %v516 = vadd.f32 %v514, %v515
    %v517 = vrot.slane %v516, 2
    %v518 = vadd.f32 %v516, %v517
    %v519 = vrot.slane %v518, 1
    %v520 = vadd.f32 %v518, %v519
    %s521 = vtos %v520
    %v522 = vstv %s521
    %v523 = vmul.f32 %v522, 0.03125
    %s524 = sld [smem:[#allocation6 + $0x1]]
    %v525 = vadd.f32 %v523, 1e-05
    %v526 = vrsqrt.pop %v525
    %v527 = vstv %s524
    %v528 = vmul.f32 %v527, %v526
    %s529 = sld [smem:[#allocation8 + $0x1]]
    %v530 = vmul.f32 %v508, %v528
    %v531 = vstv %s529
    %v532 = vsub.f32 %v531, %v530
    %v533 = vmul.f32 %v441, %v528
    %v534 = vadd.f32 %v533, %v532
    %v535 = vmax.f32 %v534, 0.0
    %v536 = vld [vmem:[#allocation9 + $0x1] sm:$0x1]
    %v537 = vadd.f32 %v535, %v536
    %538 = vst [vmem:[#allocation10 + $0x1] sm:$0x1] %v537
    %v539 = vsel %vm452, %v445, 0.0
    %v540 = vsel %vm454, %v539, 0.0
    %541 = vadd.xlane.f32.xlu0 %v540
    %v542 = vpop.xlane.xlu0 %541
    %v543 = vrot.slane %v542, 4
    %v544 = vadd.f32 %v542, %v543
    %v545 = vrot.slane %v544, 2
    %v546 = vadd.f32 %v544, %v545
    %v547 = vrot.slane %v546, 1
    %v548 = vadd.f32 %v546, %v547
    %s549 = vtos %v548
    %v550 = vstv %s549
    %v551 = vmul.f32 %v550, 0.03125
    %v552 = vsub.f32 %v445, %v551
    %v553 = vsel %vm452, %v552, 0.0
    %v554 = vmul.f32 %v553, %v553
    %v555 = vsel %vm454, %v554, 0.0
    %556 = vadd.xlane.f32.xlu0 %v555
    %v557 = vpop.xlane.xlu0 %556
    %v558 = vrot.slane %v557, 4
    %v559 = vadd.f32 %v557, %v558
    %v560 = vrot.slane %v559, 2
    %v561 = vadd.f32 %v559, %v560
    %v562 = vrot.slane %v561, 1
    %v563 = vadd.f32 %v561, %v562
    %s564 = vtos %v563
    %v565 = vstv %s564
    %v566 = vmul.f32 %v565, 0.03125
    %s567 = sld [smem:[#allocation6 + $0x2]]
    %v568 = vadd.f32 %v566, 1e-05
    %v569 = vrsqrt.pop %v568
    %v570 = vstv %s567
    %v571 = vmul.f32 %v570, %v569
    %s572 = sld [smem:[#allocation8 + $0x2]]
    %v573 = vmul.f32 %v551, %v571
    %v574 = vstv %s572
    %v575 = vsub.f32 %v574, %v573
    %v576 = vmul.f32 %v445, %v571
    %v577 = vadd.f32 %v576, %v575
    %v578 = vmax.f32 %v577, 0.0
    %v579 = vld [vmem:[#allocation9 + $0x2] sm:$0x1]
    %v580 = vadd.f32 %v578, %v579
    %581 = vst [vmem:[#allocation10 + $0x2] sm:$0x1] %v580
    %v582 = vsel %vm452, %v449, 0.0
    %v583 = vsel %vm454, %v582, 0.0
    %584 = vadd.xlane.f32.xlu0 %v583
    %v585 = vpop.xlane.xlu0 %584
    %v586 = vrot.slane %v585, 4
    %v587 = vadd.f32 %v585, %v586
    %v588 = vrot.slane %v587, 2
    %v589 = vadd.f32 %v587, %v588
    %v590 = vrot.slane %v589, 1
    %v591 = vadd.f32 %v589, %v590
    %s592 = vtos %v591
    %v593 = vstv %s592
    %v594 = vmul.f32 %v593, 0.03125
    %v595 = vsub.f32 %v449, %v594
    %v596 = vsel %vm452, %v595, 0.0
    %v597 = vmul.f32 %v596, %v596
    %v598 = vsel %vm454, %v597, 0.0
    %599 = vadd.xlane.f32.xlu0 %v598
    %v600 = vpop.xlane.xlu0 %599
    %v601 = vrot.slane %v600, 4
    %v602 = vadd.f32 %v600, %v601
    %v603 = vrot.slane %v602, 2
    %v604 = vadd.f32 %v602, %v603
    %v605 = vrot.slane %v604, 1
    %v606 = vadd.f32 %v604, %v605
    %s607 = vtos %v606
    %v608 = vstv %s607
    %v609 = vmul.f32 %v608, 0.03125
    %s610 = sld [smem:[#allocation6 + $0x3]]
    %v611 = vadd.f32 %v609, 1e-05
    %v612 = vrsqrt.pop %v611
    %v613 = vstv %s610
    %v614 = vmul.f32 %v613, %v612
    %s615 = sld [smem:[#allocation8 + $0x3]]
    %v616 = vmul.f32 %v594, %v614
    %v617 = vstv %s615
    %v618 = vsub.f32 %v617, %v616
    %v619 = vmul.f32 %v449, %v614
    %v620 = vadd.f32 %v619, %v618
    %v621 = vmax.f32 %v620, 0.0
    %v622 = vld [vmem:[#allocation9 + $0x3] sm:$0x1]
    %v623 = vadd.f32 %v621, %v622
    %624 = vst [vmem:[#allocation10 + $0x3] sm:$0x1] %v623
    // Predicated region
    $region34: #{tpu_custom_call.1} parent=1 // pred_check
      _
    $region35: #{tpu_custom_call.1} parent=1 // pred_check_branch
      %626 = sbr.rel (0) target = $region37
    $region36: #{tpu_custom_call.1} parent=1 // pred_region
      %s628 = ssub.s32 64, 64
      %629 = vsyncadd [#allocation4], %s628
      %s631 = sshll.u32 [#allocation10], 4
      %s632 = int_to_ptr.vmem [resolvable:$true] %s631
      %634 = dma.vmem_to_hbm [thread:$0]  %s632, 64, %s4, [#allocation4]
    $region37: #{tpu_custom_call.1} parent=1 // pred_fallthru
      _
    // Predicated region
    $region38: #{tpu_custom_call.1} parent=1 // pred_check
      _
    $region39: #{tpu_custom_call.1} parent=1 // pred_check_branch
      %636 = sbr.rel (0) target = $region41
    $region40: #{tpu_custom_call.1} parent=1 // pred_region
      %637 = dma.done [#allocation4], 64
    $region41: #{tpu_custom_call.1} parent=1 // pred_fallthru
      _
    %638 = vsyncpa [#allocation3], 1
    %639 = vsyncpa [#allocation4], 1
    %640 = vsyncpa [#allocation5], 1
    %641 = vsyncpa [#allocation7], 1

</llo_original>
